<compile_context>
chip_gen: v7x
topology: tpu7x:2x2x1
jax: 0.10.0
libtpu: 0.0.40
codegen_flags: <defaults>
</compile_context>

<pallas_src>
import functools
import math

import jax
import jax.numpy as jnp
from jax import lax
from jax.experimental import pallas as pl
from jax.experimental.pallas import tpu as pltpu  # noqa: F401  (kept for TPU-specific tuning hooks)

# ---------------- config (small, consistent with the module) ----------------
CONFIG = {
    "n_heads": 4,
    "emb_dim": 32,
    "context_length": 8,
    "drop_rate": 0.0,
    "qkv_bias": False,
}
EPS = 1e-5

# Rows of the packed (8, 128) parameter slab.
ROW_G1, ROW_S1, ROW_G2, ROW_S2, ROW_BO, ROW_B2, ROW_B1 = 0, 1, 2, 3, 4, 5, 6
SLAB_ROWS, SLAB_LANES = 8, 128


# ------------------------------- kernel -------------------------------------
def _transformer_block_kernel(
    x_ref,        # (B*T, D)
    wqkv_ref,     # (B*H, D, 3*Dh)   per-head fused [Wq_h | Wk_h | Wv_h], tiled over batch
    wo_ref,       # (B*H, Dh, D)     per-head rows of Wo, tiled over batch
    w1_ref,       # (D, 4D)
    w2_ref,       # (4D, D)
    vec_ref,      # (8, 128) packed {g1,s1,g2,s2,bo,b2,b1}
    out_ref,      # (B*T, D)
    *, n_heads, batch, seq,
):
    f32 = jnp.float32
    x = x_ref[...].astype(f32)                     # (BT, D)
    BT, D = x.shape
    B, T, H = batch, seq, n_heads
    Dh = D // H
    BH = B * H
    F = w1_ref.shape[1]
    scale = 1.0 / math.sqrt(Dh)

    # Packed small parameters (static row / lane slices of one VMEM tile).
    vec = vec_ref[...].astype(f32)                 # (8, 128)
    g1 = vec[ROW_G1:ROW_G1 + 1, 0:D]
    s1 = vec[ROW_S1:ROW_S1 + 1, 0:D]
    g2 = vec[ROW_G2:ROW_G2 + 1, 0:D]
    s2 = vec[ROW_S2:ROW_S2 + 1, 0:D]
    bo = vec[ROW_BO:ROW_BO + 1, 0:D]
    b2 = vec[ROW_B2:ROW_B2 + 1, 0:D]
    b1 = vec[ROW_B1:ROW_B1 + 1, 0:F]               # F == 4*D == 128 -> a full lane row

    def layernorm(h, g, s):
        mean = jnp.mean(h, axis=-1, keepdims=True)
        var = jnp.mean((h - mean) ** 2, axis=-1, keepdims=True)   # unbiased=False
        return (h - mean) * lax.rsqrt(var + EPS) * g + s

    # ---------------- attention branch ----------------
    hn = layernorm(x, g1, s1)                                      # (BT, D)

    # Heads on the leading (batch) axis: replicate rows across heads (leading-dim ops only,
    # no lane relayout), then one batched QKV matmul for all heads at once.
    hn_bh = jnp.broadcast_to(hn.reshape(B, 1, T, D), (B, H, T, D)).reshape(BH, T, D)
    qkv = jnp.einsum("ntd,ndf->ntf", hn_bh, wqkv_ref[...],
                     preferred_element_type=f32)                   # (BH, T, 3*Dh)
    q = qkv[:, :, 0:Dh]
    k = qkv[:, :, Dh:2 * Dh]
    v = qkv[:, :, 2 * Dh:3 * Dh]

    # One masked softmax pass over all (b, h) score tiles.
    s = jnp.einsum("nqd,nkd->nqk", q, k, preferred_element_type=f32) * scale   # (BH, T, T)
    row = lax.broadcasted_iota(jnp.int32, (BH, T, T), 1)
    col = lax.broadcasted_iota(jnp.int32, (BH, T, T), 2)
    s = jnp.where(col > row, -1e30, s)
    s = s - jnp.max(s, axis=-1, keepdims=True)     # diagonal never masked -> always finite
    p = jnp.exp(s)
    p = p * pl.reciprocal(jnp.sum(p, axis=-1, keepdims=True), approx=True)

    ctx = jnp.einsum("nqk,nkd->nqd", p, v, preferred_element_type=f32)          # (BH, T, Dh)

    # Per-head slice of the output projection (batched matmul), then reduce over heads.
    o_h = jnp.einsum("ntd,nde->nte", ctx, wo_ref[...],
                     preferred_element_type=f32)                   # (BH, T, D)
    o5 = o_h.reshape(B, H, T, D)
    attn = o5[:, 0]
    for hh in range(1, H):        # static H-1 adds; the per-head *compute* is fully batched
        attn = attn + o5[:, hh]
    attn = attn.reshape(BT, D) + bo

    x = x + attn                  # dropout(p) in eval mode == identity

    # ---------------- feed-forward branch ----------------
    hn2 = layernorm(x, g2, s2)
    h1 = jnp.dot(hn2, w1_ref[...], preferred_element_type=f32) + b1
    c = math.sqrt(2.0 / math.pi)                   # GELU, tanh approximation
    gelu = 0.5 * h1 * (1.0 + jnp.tanh(c * (h1 + 0.044715 * h1 * h1 * h1)))
    h2 = jnp.dot(gelu, w2_ref[...], preferred_element_type=f32) + b2

    out_ref[...] = (x + h2).astype(out_ref.dtype)


# ------------------------------- wrapper -------------------------------------
def transformer_block(x, params, *, n_heads):
    B, T, D = x.shape
    H = n_heads
    Dh = D // H
    F = params["w1"].shape[1]
    assert D % H == 0 and F == 4 * D and F <= SLAB_LANES and D <= SLAB_LANES

    x2 = x.reshape(B * T, D)

    # --- weight re-packing (in a real model these would be precomputed once & cached) ---
    # Per-head fused QKV weight, replicated over batch so heads ride the batch axis of a
    # single batched matmul: (B*H, D, 3*Dh).
    wq_h = params["wq"].reshape(D, H, Dh)
    wk_h = params["wk"].reshape(D, H, Dh)
    wv_h = params["wv"].reshape(D, H, Dh)
    wqkv_h = jnp.moveaxis(jnp.concatenate([wq_h, wk_h, wv_h], axis=-1), 1, 0)   # (H, D, 3*Dh)
    wqkv_bh = jnp.broadcast_to(wqkv_h[None], (B, H, D, 3 * Dh)).reshape(B * H, D, 3 * Dh)

    # Per-head rows of the output projection, replicated over batch: (B*H, Dh, D).
    wo_h = params["wo"].reshape(H, Dh, D)
    wo_bh = jnp.broadcast_to(wo_h[None], (B, H, Dh, D)).reshape(B * H, Dh, D)

    # Pack the seven small vectors into one (8, 128) slab (static row indices in kernel).
    slab = jnp.zeros((SLAB_ROWS, SLAB_LANES), jnp.float32)
    slab = slab.at[ROW_G1, :D].set(params["g1"].reshape(-1))
    slab = slab.at[ROW_S1, :D].set(params["s1"].reshape(-1))
    slab = slab.at[ROW_G2, :D].set(params["g2"].reshape(-1))
    slab = slab.at[ROW_S2, :D].set(params["s2"].reshape(-1))
    slab = slab.at[ROW_BO, :D].set(params["bo"].reshape(-1))
    slab = slab.at[ROW_B2, :D].set(params["b2"].reshape(-1))
    slab = slab.at[ROW_B1, :F].set(params["b1"].reshape(-1))

    kernel = functools.partial(_transformer_block_kernel, n_heads=H, batch=B, seq=T)

    # Single invocation, no grid: every operand is a whole-array VMEM block (~70 KB total),
    # well under any generation's VMEM limit.  See TODOs above for scale-up plans.
    out2 = pl.pallas_call(
        kernel,
        out_shape=jax.ShapeDtypeStruct((B * T, D), x.dtype),
    )(x2, wqkv_bh, wo_bh, params["w1"], params["w2"], slab)

    return out2.reshape(B, T, D)


# --------------------------- pure-JAX reference -------------------------------
def reference_block(x, p, *, n_heads):
    def layernorm(h, g, s):
        mean = jnp.mean(h, axis=-1, keepdims=True)
        var = jnp.mean((h - mean) ** 2, axis=-1, keepdims=True)
        return (h - mean) / jnp.sqrt(var + EPS) * g + s

    B, T, D = x.shape
    Dh = D // n_heads
    h = layernorm(x, p["g1"], p["s1"])
    q = h @ p["wq"]
    k = h @ p["wk"]
    v = h @ p["wv"]
    q = q.reshape(B, T, n_heads, Dh).transpose(0, 2, 1, 3)
    k = k.reshape(B, T, n_heads, Dh).transpose(0, 2, 1, 3)
    v = v.reshape(B, T, n_heads, Dh).transpose(0, 2, 1, 3)
    scores = jnp.einsum("bhqd,bhkd->bhqk", q, k) / math.sqrt(Dh)
    mask = jnp.triu(jnp.ones((T, T), dtype=bool), k=1)
    scores = jnp.where(mask, -1e30, scores)
    attn = jax.nn.softmax(scores, axis=-1)
    ctx = jnp.einsum("bhqk,bhkd->bhqd", attn, v).transpose(0, 2, 1, 3).reshape(B, T, D)
    attn_out = ctx @ p["wo"] + p["bo"]
    x = x + attn_out
    h = layernorm(x, p["g2"], p["s2"])
    h1 = h @ p["w1"] + p["b1"]
    gelu = 0.5 * h1 * (1.0 + jnp.tanh(math.sqrt(2.0 / math.pi) * (h1 + 0.044715 * h1 ** 3)))
    h2 = gelu @ p["w2"] + p["b2"]
    return x + h2


# ---------------------------------- main --------------------------------------
if __name__ == "__main__":
    key = jax.random.PRNGKey(0)
    B = 2
    T = CONFIG["context_length"]
    D = CONFIG["emb_dim"]
    H = CONFIG["n_heads"]
    F = 4 * D

    keys = jax.random.split(key, 8)
    params = {
        "wq": 0.02 * jax.random.normal(keys[0], (D, D), jnp.float32),
        "wk": 0.02 * jax.random.normal(keys[1], (D, D), jnp.float32),
        "wv": 0.02 * jax.random.normal(keys[2], (D, D), jnp.float32),
        "wo": 0.02 * jax.random.normal(keys[3], (D, D), jnp.float32),
        "bo": jnp.zeros((1, D), jnp.float32),
        "w1": 0.02 * jax.random.normal(keys[4], (D, F), jnp.float32),
        "b1": jnp.zeros((1, F), jnp.float32),
        "w2": 0.02 * jax.random.normal(keys[5], (F, D), jnp.float32),
        "b2": jnp.zeros((1, D), jnp.float32),
        "g1": jnp.ones((1, D), jnp.float32),
        "s1": jnp.zeros((1, D), jnp.float32),
        "g2": jnp.ones((1, D), jnp.float32),
        "s2": jnp.zeros((1, D), jnp.float32),
    }

    x = jax.random.normal(keys[6], (B, T, D), jnp.float32)

    out = transformer_block(x, params, n_heads=H)
    out = jax.block_until_ready(out)

    ref = reference_block(x, params, n_heads=H)
    assert out.shape == (B, T, D)
    # Tolerance accounts for the hardware-approximate EUP reciprocal in the softmax.
    assert jnp.allclose(out, ref, rtol=1e-3, atol=1e-3), "mismatch vs pure-JAX reference"

    print("KERNEL_OK")
</pallas_src>

<mosaic_0001>
module attributes {stable_mosaic.version = 11 : i64} {
  func.func @_transformer_block_kernel(%arg0: memref<16x32xf32, #tpu.memory_space<vmem>>, %arg1: memref<8x32x24xf32, #tpu.memory_space<vmem>>, %arg2: memref<8x8x32xf32, #tpu.memory_space<vmem>>, %arg3: memref<32x128xf32, #tpu.memory_space<vmem>>, %arg4: memref<128x32xf32, #tpu.memory_space<vmem>>, %arg5: memref<8x128xf32, #tpu.memory_space<vmem>>, %arg6: memref<16x32xf32, #tpu.memory_space<vmem>>) attributes {dimension_semantics = [], scalar_prefetch = 0 : i64, scratch_operands = 0 : i64, tpu.core_type = #tpu.core_type<tc>} {
    %c0 = arith.constant 0 : index
    %c0_0 = arith.constant 0 : index
    %0 = vector.load %arg0[%c0, %c0_0] : memref<16x32xf32, #tpu.memory_space<vmem>>, vector<16x32xf32>
    %c0_1 = arith.constant 0 : index
    %c0_2 = arith.constant 0 : index
    %1 = vector.load %arg5[%c0_1, %c0_2] : memref<8x128xf32, #tpu.memory_space<vmem>>, vector<8x128xf32>
    %2 = vector.extract_strided_slice %1 {offsets = [0, 0], sizes = [1, 32], strides = [1, 1]} : vector<8x128xf32> to vector<1x32xf32>
    %3 = vector.extract_strided_slice %1 {offsets = [1, 0], sizes = [1, 32], strides = [1, 1]} : vector<8x128xf32> to vector<1x32xf32>
    %4 = vector.extract_strided_slice %1 {offsets = [2, 0], sizes = [1, 32], strides = [1, 1]} : vector<8x128xf32> to vector<1x32xf32>
    %5 = vector.extract_strided_slice %1 {offsets = [3, 0], sizes = [1, 32], strides = [1, 1]} : vector<8x128xf32> to vector<1x32xf32>
    %6 = vector.extract_strided_slice %1 {offsets = [4, 0], sizes = [1, 32], strides = [1, 1]} : vector<8x128xf32> to vector<1x32xf32>
    %7 = vector.extract_strided_slice %1 {offsets = [5, 0], sizes = [1, 32], strides = [1, 1]} : vector<8x128xf32> to vector<1x32xf32>
    %8 = vector.extract_strided_slice %1 {offsets = [6, 0], sizes = [1, 128], strides = [1, 1]} : vector<8x128xf32> to vector<1x128xf32>
    %cst = arith.constant dense<0.000000e+00> : vector<16xf32>
    %9 = vector.multi_reduction <add>, %0, %cst [1] : vector<16x32xf32> to vector<16xf32>
    %10 = vector.shape_cast %9 : vector<16xf32> to vector<16x1xf32>
    %cst_3 = arith.constant 3.200000e+01 : f32
    %11 = vector.broadcast %cst_3 : f32 to vector<16x1xf32>
    %12 = arith.divf %10, %11 : vector<16x1xf32>
    %13 = vector.broadcast %12 : vector<16x1xf32> to vector<16x32xf32>
    %14 = arith.subf %0, %13 : vector<16x32xf32>
    %15 = arith.mulf %14, %14 : vector<16x32xf32>
    %cst_4 = arith.constant dense<0.000000e+00> : vector<16xf32>
    %16 = vector.multi_reduction <add>, %15, %cst_4 [1] : vector<16x32xf32> to vector<16xf32>
    %17 = vector.shape_cast %16 : vector<16xf32> to vector<16x1xf32>
    %cst_5 = arith.constant 3.200000e+01 : f32
    %18 = vector.broadcast %cst_5 : f32 to vector<16x1xf32>
    %19 = arith.divf %17, %18 : vector<16x1xf32>
    %20 = vector.broadcast %12 : vector<16x1xf32> to vector<16x32xf32>
    %21 = arith.subf %0, %20 : vector<16x32xf32>
    %cst_6 = arith.constant 9.99999974E-6 : f32
    %22 = vector.broadcast %cst_6 : f32 to vector<16x1xf32>
    %23 = arith.addf %19, %22 : vector<16x1xf32>
    %24 = math.rsqrt %23 : vector<16x1xf32>
    %25 = vector.broadcast %24 : vector<16x1xf32> to vector<16x32xf32>
    %26 = arith.mulf %21, %25 : vector<16x32xf32>
    %27 = vector.broadcast %2 : vector<1x32xf32> to vector<16x32xf32>
    %28 = arith.mulf %26, %27 : vector<16x32xf32>
    %29 = vector.broadcast %3 : vector<1x32xf32> to vector<16x32xf32>
    %30 = arith.addf %28, %29 : vector<16x32xf32>
    %31 = vector.shape_cast %30 : vector<16x32xf32> to vector<2x1x8x32xf32>
    %32 = vector.shape_cast %31 : vector<2x1x8x32xf32> to vector<2x1x8x32xf32>
    %33 = vector.broadcast %32 : vector<2x1x8x32xf32> to vector<2x4x8x32xf32>
    %34 = vector.shape_cast %33 : vector<2x4x8x32xf32> to vector<8x8x32xf32>
    %c0_7 = arith.constant 0 : index
    %c0_8 = arith.constant 0 : index
    %c0_9 = arith.constant 0 : index
    %35 = vector.load %arg1[%c0_7, %c0_8, %c0_9] : memref<8x32x24xf32, #tpu.memory_space<vmem>>, vector<8x32x24xf32>
    "tpu.trace_start"() <{level = 10 : i32, message = "ntd,ndf->ntf"}> : () -> ()
    %cst_10 = arith.constant dense<0.000000e+00> : vector<8x8x24xf32>
    %36 = tpu.matmul %34, %35, %cst_10 {dimension_numbers = #tpu.dot_dimension_numbers<[2], [1], [1], [2], [0, 0, 0, 1, 1, 2], [0], [0]>} : vector<8x8x32xf32>, vector<8x32x24xf32>, vector<8x8x24xf32> -> vector<8x8x24xf32>
    "tpu.trace_stop"() : () -> ()
    %37 = vector.extract_strided_slice %36 {offsets = [0, 0, 0], sizes = [8, 8, 8], strides = [1, 1, 1]} : vector<8x8x24xf32> to vector<8x8x8xf32>
    %38 = vector.extract_strided_slice %36 {offsets = [0, 0, 8], sizes = [8, 8, 8], strides = [1, 1, 1]} : vector<8x8x24xf32> to vector<8x8x8xf32>
    %39 = vector.extract_strided_slice %36 {offsets = [0, 0, 16], sizes = [8, 8, 8], strides = [1, 1, 1]} : vector<8x8x24xf32> to vector<8x8x8xf32>
    "tpu.trace_start"() <{level = 10 : i32, message = "nqd,nkd->nqk"}> : () -> ()
    %cst_11 = arith.constant dense<0.000000e+00> : vector<8x8x8xf32>
    %40 = tpu.matmul %37, %38, %cst_11 {dimension_numbers = #tpu.dot_dimension_numbers<[2], [2], [1], [1], [0, 0, 0, 1, 1, 1], [0], [0]>} : vector<8x8x8xf32>, vector<8x8x8xf32>, vector<8x8x8xf32> -> vector<8x8x8xf32>
    "tpu.trace_stop"() : () -> ()
    %cst_12 = arith.constant 0.353553385 : f32
    %41 = vector.broadcast %cst_12 : f32 to vector<8x8x8xf32>
    %42 = arith.mulf %40, %41 : vector<8x8x8xf32>
    %43 = tpu.iota {dimensions = array<i32: 1>} : vector<8x8x8xi32>
    %44 = tpu.iota {dimensions = array<i32: 2>} : vector<8x8x8xi32>
    %45 = arith.cmpi sgt, %44, %43 : vector<8x8x8xi32>
    %cst_13 = arith.constant -1.000000e+30 : f32
    %46 = vector.broadcast %cst_13 : f32 to vector<8x8x8xf32>
    %47 = arith.select %45, %46, %42 : vector<8x8x8xi1>, vector<8x8x8xf32>
    %cst_14 = arith.constant dense<0xFF800000> : vector<8x8xf32>
    %48 = vector.multi_reduction <maximumf>, %47, %cst_14 [2] : vector<8x8x8xf32> to vector<8x8xf32>
    %49 = vector.shape_cast %48 : vector<8x8xf32> to vector<8x8x1xf32>
    %50 = vector.broadcast %49 : vector<8x8x1xf32> to vector<8x8x8xf32>
    %51 = arith.subf %47, %50 : vector<8x8x8xf32>
    %52 = math.exp %51 : vector<8x8x8xf32>
    %cst_15 = arith.constant dense<0.000000e+00> : vector<8x8xf32>
    %53 = vector.multi_reduction <add>, %52, %cst_15 [2] : vector<8x8x8xf32> to vector<8x8xf32>
    %54 = vector.shape_cast %53 : vector<8x8xf32> to vector<8x8x1xf32>
    %55 = tpu.reciprocal %54 {approx = true} : vector<8x8x1xf32> -> vector<8x8x1xf32>
    %56 = vector.broadcast %55 : vector<8x8x1xf32> to vector<8x8x8xf32>
    %57 = arith.mulf %52, %56 : vector<8x8x8xf32>
    "tpu.trace_start"() <{level = 10 : i32, message = "nqk,nkd->nqd"}> : () -> ()
    %cst_16 = arith.constant dense<0.000000e+00> : vector<8x8x8xf32>
    %58 = tpu.matmul %57, %39, %cst_16 {dimension_numbers = #tpu.dot_dimension_numbers<[2], [1], [1], [2], [0, 0, 0, 1, 1, 2], [0], [0]>} : vector<8x8x8xf32>, vector<8x8x8xf32>, vector<8x8x8xf32> -> vector<8x8x8xf32>
    "tpu.trace_stop"() : () -> ()
    %c0_17 = arith.constant 0 : index
    %c0_18 = arith.constant 0 : index
    %c0_19 = arith.constant 0 : index
    %59 = vector.load %arg2[%c0_17, %c0_18, %c0_19] : memref<8x8x32xf32, #tpu.memory_space<vmem>>, vector<8x8x32xf32>
    "tpu.trace_start"() <{level = 10 : i32, message = "ntd,nde->nte"}> : () -> ()
    %cst_20 = arith.constant dense<0.000000e+00> : vector<8x8x32xf32>
    %60 = tpu.matmul %58, %59, %cst_20 {dimension_numbers = #tpu.dot_dimension_numbers<[2], [1], [1], [2], [0, 0, 0, 1, 1, 2], [0], [0]>} : vector<8x8x8xf32>, vector<8x8x32xf32>, vector<8x8x32xf32> -> vector<8x8x32xf32>
    "tpu.trace_stop"() : () -> ()
    %61 = vector.shape_cast %60 : vector<8x8x32xf32> to vector<2x4x8x32xf32>
    %62 = vector.extract_strided_slice %61 {offsets = [0, 0, 0, 0], sizes = [2, 1, 8, 32], strides = [1, 1, 1, 1]} : vector<2x4x8x32xf32> to vector<2x1x8x32xf32>
    %63 = vector.shape_cast %62 : vector<2x1x8x32xf32> to vector<2x8x32xf32>
    %64 = vector.extract_strided_slice %61 {offsets = [0, 1, 0, 0], sizes = [2, 1, 8, 32], strides = [1, 1, 1, 1]} : vector<2x4x8x32xf32> to vector<2x1x8x32xf32>
    %65 = vector.shape_cast %64 : vector<2x1x8x32xf32> to vector<2x8x32xf32>
    %66 = arith.addf %63, %65 : vector<2x8x32xf32>
    %67 = vector.extract_strided_slice %61 {offsets = [0, 2, 0, 0], sizes = [2, 1, 8, 32], strides = [1, 1, 1, 1]} : vector<2x4x8x32xf32> to vector<2x1x8x32xf32>
    %68 = vector.shape_cast %67 : vector<2x1x8x32xf32> to vector<2x8x32xf32>
    %69 = arith.addf %66, %68 : vector<2x8x32xf32>
    %70 = vector.extract_strided_slice %61 {offsets = [0, 3, 0, 0], sizes = [2, 1, 8, 32], strides = [1, 1, 1, 1]} : vector<2x4x8x32xf32> to vector<2x1x8x32xf32>
    %71 = vector.shape_cast %70 : vector<2x1x8x32xf32> to vector<2x8x32xf32>
    %72 = arith.addf %69, %71 : vector<2x8x32xf32>
    %73 = vector.shape_cast %72 : vector<2x8x32xf32> to vector<16x32xf32>
    %74 = vector.broadcast %6 : vector<1x32xf32> to vector<16x32xf32>
    %75 = arith.addf %73, %74 : vector<16x32xf32>
    %76 = arith.addf %0, %75 : vector<16x32xf32>
    %cst_21 = arith.constant dense<0.000000e+00> : vector<16xf32>
    %77 = vector.multi_reduction <add>, %76, %cst_21 [1] : vector<16x32xf32> to vector<16xf32>
    %78 = vector.shape_cast %77 : vector<16xf32> to vector<16x1xf32>
    %cst_22 = arith.constant 3.200000e+01 : f32
    %79 = vector.broadcast %cst_22 : f32 to vector<16x1xf32>
    %80 = arith.divf %78, %79 : vector<16x1xf32>
    %81 = vector.broadcast %80 : vector<16x1xf32> to vector<16x32xf32>
    %82 = arith.subf %76, %81 : vector<16x32xf32>
    %83 = arith.mulf %82, %82 : vector<16x32xf32>
    %cst_23 = arith.constant dense<0.000000e+00> : vector<16xf32>
    %84 = vector.multi_reduction <add>, %83, %cst_23 [1] : vector<16x32xf32> to vector<16xf32>
    %85 = vector.shape_cast %84 : vector<16xf32> to vector<16x1xf32>
    %cst_24 = arith.constant 3.200000e+01 : f32
    %86 = vector.broadcast %cst_24 : f32 to vector<16x1xf32>
    %87 = arith.divf %85, %86 : vector<16x1xf32>
    %88 = vector.broadcast %80 : vector<16x1xf32> to vector<16x32xf32>
    %89 = arith.subf %76, %88 : vector<16x32xf32>
    %cst_25 = arith.constant 9.99999974E-6 : f32
    %90 = vector.broadcast %cst_25 : f32 to vector<16x1xf32>
    %91 = arith.addf %87, %90 : vector<16x1xf32>
    %92 = math.rsqrt %91 : vector<16x1xf32>
    %93 = vector.broadcast %92 : vector<16x1xf32> to vector<16x32xf32>
    %94 = arith.mulf %89, %93 : vector<16x32xf32>
    %95 = vector.broadcast %4 : vector<1x32xf32> to vector<16x32xf32>
    %96 = arith.mulf %94, %95 : vector<16x32xf32>
    %97 = vector.broadcast %5 : vector<1x32xf32> to vector<16x32xf32>
    %98 = arith.addf %96, %97 : vector<16x32xf32>
    %c0_26 = arith.constant 0 : index
    %c0_27 = arith.constant 0 : index
    %99 = vector.load %arg3[%c0_26, %c0_27] : memref<32x128xf32, #tpu.memory_space<vmem>>, vector<32x128xf32>
    %cst_28 = arith.constant dense<0.000000e+00> : vector<16x128xf32>
    %100 = tpu.matmul %98, %99, %cst_28 {dimension_numbers = #tpu.dot_dimension_numbers<[1], [0], [0], [1], [0, 0, 1, 1], [], []>} : vector<16x32xf32>, vector<32x128xf32>, vector<16x128xf32> -> vector<16x128xf32>
    %101 = vector.broadcast %8 : vector<1x128xf32> to vector<16x128xf32>
    %102 = arith.addf %100, %101 : vector<16x128xf32>
    %cst_29 = arith.constant 5.000000e-01 : f32
    %103 = vector.broadcast %cst_29 : f32 to vector<16x128xf32>
    %104 = arith.mulf %103, %102 : vector<16x128xf32>
    %cst_30 = arith.constant 4.471500e-02 : f32
    %105 = vector.broadcast %cst_30 : f32 to vector<16x128xf32>
    %106 = arith.mulf %105, %102 : vector<16x128xf32>
    %107 = arith.mulf %106, %102 : vector<16x128xf32>
    %108 = arith.mulf %107, %102 : vector<16x128xf32>
    %109 = arith.addf %102, %108 : vector<16x128xf32>
    %cst_31 = arith.constant 0.797884583 : f32
    %110 = vector.broadcast %cst_31 : f32 to vector<16x128xf32>
    %111 = arith.mulf %110, %109 : vector<16x128xf32>
    %112 = math.tanh %111 : vector<16x128xf32>
    %cst_32 = arith.constant 1.000000e+00 : f32
    %113 = vector.broadcast %cst_32 : f32 to vector<16x128xf32>
    %114 = arith.addf %113, %112 : vector<16x128xf32>
    %115 = arith.mulf %104, %114 : vector<16x128xf32>
    %c0_33 = arith.constant 0 : index
    %c0_34 = arith.constant 0 : index
    %116 = vector.load %arg4[%c0_33, %c0_34] : memref<128x32xf32, #tpu.memory_space<vmem>>, vector<128x32xf32>
    %cst_35 = arith.constant dense<0.000000e+00> : vector<16x32xf32>
    %117 = tpu.matmul %115, %116, %cst_35 {dimension_numbers = #tpu.dot_dimension_numbers<[1], [0], [0], [1], [0, 0, 1, 1], [], []>} : vector<16x128xf32>, vector<128x32xf32>, vector<16x32xf32> -> vector<16x32xf32>
    %118 = vector.broadcast %7 : vector<1x32xf32> to vector<16x32xf32>
    %119 = arith.addf %117, %118 : vector<16x32xf32>
    %120 = arith.addf %76, %119 : vector<16x32xf32>
    %c0_36 = arith.constant 0 : index
    %c0_37 = arith.constant 0 : index
    %121 = vector.load %arg6[%c0_36, %c0_37] : memref<16x32xf32, #tpu.memory_space<vmem>>, vector<16x32xf32>
    tpu.vector_store %arg6[%c0_36, %c0_37], %120 {strides = array<i32>} : memref<16x32xf32, #tpu.memory_space<vmem>>, vector<16x32xf32>,
    return
  }
}

</mosaic_0001>

<llo_original>
// kernel: tpu_custom_call.1
$region0: #{tpu_custom_call.1}
  #allocation0 [shape = 'u32[]', space=smem, size = 0x4, offset = 0x4, fixed_abs, tag = 'smem constant byte address 0x4 - core index']
  #allocation1 [shape = 'u32[144,128]{1,0:T(1,128)}', space=vmem, size = 0x12000, scoped, tag = 'internal scratch']
  %s0 = inlined_call_operand.vmem [shape: f32[16,32], index: 0, kind: input, shape index: {}]
  %s1 = inlined_call_operand.vmem [shape: f32[8,32,24], index: 1, kind: input, shape index: {}]
  %s2 = inlined_call_operand.vmem [shape: f32[8,8,32], index: 2, kind: input, shape index: {}]
  %s3 = inlined_call_operand.vmem [shape: f32[32,128], index: 3, kind: input, shape index: {}]
  %s4 = inlined_call_operand.vmem [shape: f32[128,32], index: 4, kind: input, shape index: {}]
  %s5 = inlined_call_operand.vmem [shape: f32[8,128], index: 5, kind: input, shape index: {}]
  %s6 = inlined_call_operand.hbm [shape: f32[16,32], index: 6, kind: output, shape index: {}]
  %s7 = sld [smem:[#allocation0]]
  $region34: #{tpu_custom_call.1} parent=0
    _
  %s9 = ssub.s32 1, %s7
  %s10 = scalar_select 0, %s9, %s7
  $region1: #{tpu_custom_call.1} parent=0
    #allocation2 [shape = 'u8[8192]{0}', space=vmem, size = 0x2000, scoped, tag = 'output window, operand 0, single buffered']
    #allocation3 [shape = 's32[1]{0}', space=sflag, size = 0x4, scoped, tag = 'scoped memory for tpu_custom_call.1']
    %11 = vsyncpa [#allocation3], 0
    // Predicated region
    $region2: #{tpu_custom_call.1} parent=1 // pred_check
      _
    $region3: #{tpu_custom_call.1} parent=1 // pred_check_branch
      %13 = sbr.rel (0) target = $region5
    $region4: #{tpu_custom_call.1} parent=1 // pred_region
      _
    $region5: #{tpu_custom_call.1} parent=1 // pred_fallthru
      _
    // Predicated region
    $region6: #{tpu_custom_call.1} parent=1 // pred_check
      _
    $region7: #{tpu_custom_call.1} parent=1 // pred_check_branch
      %15 = sbr.rel (0) target = $region9
    $region8: #{tpu_custom_call.1} parent=1 // pred_region
      _
    $region9: #{tpu_custom_call.1} parent=1 // pred_fallthru
      _
    // Predicated region
    $region10: #{tpu_custom_call.1} parent=1 // pred_check
      _
    $region11: #{tpu_custom_call.1} parent=1 // pred_check_branch
      %17 = sbr.rel (0) target = $region13
    $region12: #{tpu_custom_call.1} parent=1 // pred_region
      _
    $region13: #{tpu_custom_call.1} parent=1 // pred_fallthru
      _
    // Predicated region
    $region14: #{tpu_custom_call.1} parent=1 // pred_check
      _
    $region15: #{tpu_custom_call.1} parent=1 // pred_check_branch
      %19 = sbr.rel (0) target = $region17
    $region16: #{tpu_custom_call.1} parent=1 // pred_region
      _
    $region17: #{tpu_custom_call.1} parent=1 // pred_fallthru
      _
    // Predicated region
    $region18: #{tpu_custom_call.1} parent=1 // pred_check
      _
    $region19: #{tpu_custom_call.1} parent=1 // pred_check_branch
      %21 = sbr.rel (0) target = $region21
    $region20: #{tpu_custom_call.1} parent=1 // pred_region
      _
    $region21: #{tpu_custom_call.1} parent=1 // pred_fallthru
      _
    // Predicated region
    $region22: #{tpu_custom_call.1} parent=1 // pred_check
      _
    $region23: #{tpu_custom_call.1} parent=1 // pred_check_branch
      %23 = sbr.rel (0) target = $region25
    $region24: #{tpu_custom_call.1} parent=1 // pred_region
      _
    $region25: #{tpu_custom_call.1} parent=1 // pred_fallthru
      _
    %v24 = vld [vmem:[%s0] sm:$0xff]
    %v25 = vld [vmem:[%s0 + $0x8] sm:$0xff]
    %v26 = vld [vmem:[%s5] sm:$0xff]
    %vm27 = vcmask 261120
    %v28 = vsel %vm27, %v24, 0.0
    %29 = vadd.xlane.f32.xlu0 %v28
    %v30 = vpop.xlane.xlu0 %29
    %v31 = vsel %vm27, %v25, 0.0
    %32 = vadd.xlane.f32.xlu0 %v31
    %v33 = vpop.xlane.xlu0 %32
    %v34 = vrcp.pop 32.0
    %v35 = vmul.f32 %v30, %v34
    %v36 = vmul.f32 %v33, %v34
    %v37 = vsub.f32 %v24, %v35
    %v38 = vsub.f32 %v25, %v36
    %v39 = vmul.f32 %v37, %v37
    %v40 = vmul.f32 %v38, %v38
    %v41 = vsel %vm27, %v39, 0.0
    %42 = vadd.xlane.f32.xlu0 %v41
    %v43 = vpop.xlane.xlu0 %42
    %v44 = vsel %vm27, %v40, 0.0
    %45 = vadd.xlane.f32.xlu0 %v44
    %v46 = vpop.xlane.xlu0 %45
    %v47 = vmul.f32 %v43, %v34
    %v48 = vmul.f32 %v46, %v34
    %v49 = vadd.f32 %v47, 1e-05
    %v50 = vadd.f32 %v48, 1e-05
    %v51 = vrsqrt.pop %v49
    %v52 = vrsqrt.pop %v50
    %v53 = vmul.f32 %v37, %v51
    %v54 = vmul.f32 %v38, %v52
    %v55 = vlaneseq
    %v56 = vshrl.u32 %v55, 7
    %v57 = vsub.s32 0, %v56
    %v58 = vrot.slane %v26, %v57
    %v59 = vmul.f32 %v53, %v58
    %v60 = vmul.f32 %v54, %v58
    %v61 = vlaneseq
    %v62 = vshrl.u32 %v61, 7
    %v63 = vsub.s32 1, %v62
    %v64 = vrot.slane %v26, %v63
    %v65 = vadd.f32 %v59, %v64
    %v66 = vadd.f32 %v60, %v64
    %v67 = vld [vmem:[%s1] sm:$0xff]
    %v68 = vld [vmem:[%s1 + $0x8] sm:$0xff]
    %v69 = vld [vmem:[%s1 + $0x10] sm:$0xff]
    %v70 = vld [vmem:[%s1 + $0x18] sm:$0xff]
    %v71 = vld [vmem:[%s1 + $0x20] sm:$0xff]
    %v72 = vld [vmem:[%s1 + $0x28] sm:$0xff]
    %v73 = vld [vmem:[%s1 + $0x30] sm:$0xff]
    %v74 = vld [vmem:[%s1 + $0x38] sm:$0xff]
    %v75 = vld [vmem:[%s1 + $0x40] sm:$0xff]
    %v76 = vld [vmem:[%s1 + $0x48] sm:$0xff]
    %v77 = vld [vmem:[%s1 + $0x50] sm:$0xff]
    %v78 = vld [vmem:[%s1 + $0x58] sm:$0xff]
    %v79 = vld [vmem:[%s1 + $0x60] sm:$0xff]
    %v80 = vld [vmem:[%s1 + $0x68] sm:$0xff]
    %v81 = vld [vmem:[%s1 + $0x70] sm:$0xff]
    %v82 = vld [vmem:[%s1 + $0x78] sm:$0xff]
    %v83 = vld [vmem:[%s1 + $0x80] sm:$0xff]
    %v84 = vld [vmem:[%s1 + $0x88] sm:$0xff]
    %v85 = vld [vmem:[%s1 + $0x90] sm:$0xff]
    %v86 = vld [vmem:[%s1 + $0x98] sm:$0xff]
    %v87 = vld [vmem:[%s1 + $0xa0] sm:$0xff]
    %v88 = vld [vmem:[%s1 + $0xa8] sm:$0xff]
    %v89 = vld [vmem:[%s1 + $0xb0] sm:$0xff]
    %v90 = vld [vmem:[%s1 + $0xb8] sm:$0xff]
    %v91 = vld [vmem:[%s1 + $0xc0] sm:$0xff]
    %v92 = vld [vmem:[%s1 + $0xc8] sm:$0xff]
    %v93 = vld [vmem:[%s1 + $0xd0] sm:$0xff]
    %v94 = vld [vmem:[%s1 + $0xd8] sm:$0xff]
    %v95 = vld [vmem:[%s1 + $0xe0] sm:$0xff]
    %v96 = vld [vmem:[%s1 + $0xe8] sm:$0xff]
    %v97 = vld [vmem:[%s1 + $0xf0] sm:$0xff]
    %v98 = vld [vmem:[%s1 + $0xf8] sm:$0xff]
    %v100 = vsel %vm27, %v65, 0
    %102 = vmatprep.subr.mxu0 0.0
    %103 = vmatpush1.msra.mxu0 %v67
    %104 = vmatprep.subr.mxu0 0.0
    %105 = vmatpush1.msra.mxu0 %v68
    %106 = vmatprep.subr.mxu0 0.0
    %107 = vmatpush1.msra.mxu0 %v69
    %108 = vmatprep.subr.mxu0 0.0
    %109 = vmatpush1.msra.mxu0 %v70
    %110 = vmatprep.subr.mxu0 0.0
    %111 = vmatpush1.msra.mxu0 0.0
    %112 = vmatprep.subr.mxu0 0.0
    %113 = vmatpush1.msra.mxu0 0.0
    %114 = vmatprep.subr.mxu0 0.0
    %115 = vmatpush1.msra.mxu0 0.0
    %116 = vmatprep.subr.mxu0 0.0
    %117 = vmatpush1.msra.mxu0 0.0
    %118 = vmatprep.subr.mxu0 0.0
    %119 = vmatpush1.msra.mxu0 0.0
    %120 = vmatprep.subr.mxu0 0.0
    %121 = vmatpush1.msra.mxu0 0.0
    %122 = vmatprep.subr.mxu0 0.0
    %123 = vmatpush1.msra.mxu0 0.0
    %124 = vmatprep.subr.mxu0 0.0
    %125 = vmatpush1.msra.mxu0 0.0
    %126 = vmatprep.subr.mxu0 0.0
    %127 = vmatpush1.msra.mxu0 0.0
    %128 = vmatprep.subr.mxu0 0.0
    %129 = vmatpush1.msra.mxu0 0.0
    %130 = vmatprep.subr.mxu0 0.0
    %131 = vmatpush1.msra.mxu0 0.0
    %132 = vmatprep.subr.mxu0 0.0
    %133 = vmatpush1.msra.mxu0 0.0
    %134 = vmatprep.subr.mxu0 0.0
    %135 = vmatpush1.msra.mxu0 0.0
    %136 = vmatprep.subr.mxu0 0.0
    %137 = vmatpush1.msra.mxu0 0.0
    %138 = vmatprep.subr.mxu0 0.0
    %139 = vmatpush1.msra.mxu0 0.0
    %140 = vmatprep.subr.mxu0 0.0
    %141 = vmatpush1.msra.mxu0 0.0
    %142 = vmatprep.subr.mxu0 0.0
    %143 = vmatpush1.msra.mxu0 0.0
    %144 = vmatprep.subr.mxu0 0.0
    %145 = vmatpush1.msra.mxu0 0.0
    %146 = vmatprep.subr.mxu0 0.0
    %147 = vmatpush1.msra.mxu0 0.0
    %148 = vmatprep.subr.mxu0 0.0
    %149 = vmatpush1.msra.mxu0 0.0
    %150 = vmatprep.subr.mxu0 0.0
    %151 = vmatpush1.msra.mxu0 0.0
    %152 = vmatprep.subr.mxu0 0.0
    %153 = vmatpush1.msra.mxu0 0.0
    %154 = vmatprep.subr.mxu0 0.0
    %155 = vmatpush1.msra.mxu0 0.0
    %156 = vmatprep.subr.mxu0 0.0
    %157 = vmatpush1.msra.mxu0 0.0
    %158 = vmatprep.subr.mxu0 0.0
    %159 = vmatpush1.msra.mxu0 0.0
    %160 = vmatprep.subr.mxu0 0.0
    %161 = vmatpush1.msra.mxu0 0.0
    %162 = vmatprep.subr.mxu0 0.0
    %163 = vmatpush1.msra.mxu0 0.0
    %164 = vmatprep.subr.mxu0 0.0
    %165 = vmatpush1.msra.mxu0 0.0
    %166 = vmatprep.mubr.f32.mxu0 0.0
    %167 = vmatmul.mubr.f32.gmra.mrb[0].mxu0 %v100
    %v168 = vpop.f32.mrb[0].mxu0
    %v169 = vadd.f32 0.0, %v168
    %v170 = vpop.f32.mrb[0].mxu0
    %171 = vdwg.mxu0
    %172 = vmatprep.subr.mxu0 0.0
    %173 = vmatpush1.msra.mxu0 %v71
    %174 = vmatprep.subr.mxu0 0.0
    %175 = vmatpush1.msra.mxu0 %v72
    %176 = vmatprep.subr.mxu0 0.0
    %177 = vmatpush1.msra.mxu0 %v73
    %178 = vmatprep.subr.mxu0 0.0
    %179 = vmatpush1.msra.mxu0 %v74
    %180 = vmatprep.subr.mxu0 0.0
    %181 = vmatpush1.msra.mxu0 0.0
    %182 = vmatprep.subr.mxu0 0.0
    %183 = vmatpush1.msra.mxu0 0.0
    %184 = vmatprep.subr.mxu0 0.0
    %185 = vmatpush1.msra.mxu0 0.0
    %186 = vmatprep.subr.mxu0 0.0
    %187 = vmatpush1.msra.mxu0 0.0
    %188 = vmatprep.subr.mxu0 0.0
    %189 = vmatpush1.msra.mxu0 0.0
    %190 = vmatprep.subr.mxu0 0.0
    %191 = vmatpush1.msra.mxu0 0.0
    %192 = vmatprep.subr.mxu0 0.0
    %193 = vmatpush1.msra.mxu0 0.0
    %194 = vmatprep.subr.mxu0 0.0
    %195 = vmatpush1.msra.mxu0 0.0
    %196 = vmatprep.subr.mxu0 0.0
    %197 = vmatpush1.msra.mxu0 0.0
    %198 = vmatprep.subr.mxu0 0.0
    %199 = vmatpush1.msra.mxu0 0.0
    %200 = vmatprep.subr.mxu0 0.0
    %201 = vmatpush1.msra.mxu0 0.0
    %202 = vmatprep.subr.mxu0 0.0
    %203 = vmatpush1.msra.mxu0 0.0
    %204 = vmatprep.subr.mxu0 0.0
    %205 = vmatpush1.msra.mxu0 0.0
    %206 = vmatprep.subr.mxu0 0.0
    %207 = vmatpush1.msra.mxu0 0.0
    %208 = vmatprep.subr.mxu0 0.0
    %209 = vmatpush1.msra.mxu0 0.0
    %210 = vmatprep.subr.mxu0 0.0
    %211 = vmatpush1.msra.mxu0 0.0
    %212 = vmatprep.subr.mxu0 0.0
    %213 = vmatpush1.msra.mxu0 0.0
    %214 = vmatprep.subr.mxu0 0.0
    %215 = vmatpush1.msra.mxu0 0.0
    %216 = vmatprep.subr.mxu0 0.0
    %217 = vmatpush1.msra.mxu0 0.0
    %218 = vmatprep.subr.mxu0 0.0
    %219 = vmatpush1.msra.mxu0 0.0
    %220 = vmatprep.subr.mxu0 0.0
    %221 = vmatpush1.msra.mxu0 0.0
    %222 = vmatprep.subr.mxu0 0.0
    %223 = vmatpush1.msra.mxu0 0.0
    %224 = vmatprep.subr.mxu0 0.0
    %225 = vmatpush1.msra.mxu0 0.0
    %226 = vmatprep.subr.mxu0 0.0
    %227 = vmatpush1.msra.mxu0 0.0
    %228 = vmatprep.subr.mxu0 0.0
    %229 = vmatpush1.msra.mxu0 0.0
    %230 = vmatprep.subr.mxu0 0.0
    %231 = vmatpush1.msra.mxu0 0.0
    %232 = vmatprep.subr.mxu0 0.0
    %233 = vmatpush1.msra.mxu0 0.0
    %234 = vmatprep.subr.mxu0 0.0
    %235 = vmatpush1.msra.mxu0 0.0
    %236 = vmatprep.mubr.f32.mxu0 0.0
    %237 = vmatmul.mubr.f32.gmra.mrb[0].mxu0 %v100
    %v238 = vpop.f32.mrb[0].mxu0
    %v239 = vadd.f32 0.0, %v238
    %v240 = vpop.f32.mrb[0].mxu0
    %241 = vdwg.mxu0
    %242 = vmatprep.subr.mxu0 0.0
    %243 = vmatpush1.msra.mxu0 %v75
    %244 = vmatprep.subr.mxu0 0.0
    %245 = vmatpush1.msra.mxu0 %v76
    %246 = vmatprep.subr.mxu0 0.0
    %247 = vmatpush1.msra.mxu0 %v77
    %248 = vmatprep.subr.mxu0 0.0
    %249 = vmatpush1.msra.mxu0 %v78
    %250 = vmatprep.subr.mxu0 0.0
    %251 = vmatpush1.msra.mxu0 0.0
    %252 = vmatprep.subr.mxu0 0.0
    %253 = vmatpush1.msra.mxu0 0.0
    %254 = vmatprep.subr.mxu0 0.0
    %255 = vmatpush1.msra.mxu0 0.0
    %256 = vmatprep.subr.mxu0 0.0
    %257 = vmatpush1.msra.mxu0 0.0
    %258 = vmatprep.subr.mxu0 0.0
    %259 = vmatpush1.msra.mxu0 0.0
    %260 = vmatprep.subr.mxu0 0.0
    %261 = vmatpush1.msra.mxu0 0.0
    %262 = vmatprep.subr.mxu0 0.0
    %263 = vmatpush1.msra.mxu0 0.0
    %264 = vmatprep.subr.mxu0 0.0
    %265 = vmatpush1.msra.mxu0 0.0
    %266 = vmatprep.subr.mxu0 0.0
    %267 = vmatpush1.msra.mxu0 0.0
    %268 = vmatprep.subr.mxu0 0.0
    %269 = vmatpush1.msra.mxu0 0.0
    %270 = vmatprep.subr.mxu0 0.0
    %271 = vmatpush1.msra.mxu0 0.0
    %272 = vmatprep.subr.mxu0 0.0
    %273 = vmatpush1.msra.mxu0 0.0
    %274 = vmatprep.subr.mxu0 0.0
    %275 = vmatpush1.msra.mxu0 0.0
    %276 = vmatprep.subr.mxu0 0.0
    %277 = vmatpush1.msra.mxu0 0.0
    %278 = vmatprep.subr.mxu0 0.0
    %279 = vmatpush1.msra.mxu0 0.0
    %280 = vmatprep.subr.mxu0 0.0
    %281 = vmatpush1.msra.mxu0 0.0
    %282 = vmatprep.subr.mxu0 0.0
    %283 = vmatpush1.msra.mxu0 0.0
    %284 = vmatprep.subr.mxu0 0.0
    %285 = vmatpush1.msra.mxu0 0.0
    %286 = vmatprep.subr.mxu0 0.0
    %287 = vmatpush1.msra.mxu0 0.0
    %288 = vmatprep.subr.mxu0 0.0
    %289 = vmatpush1.msra.mxu0 0.0
    %290 = vmatprep.subr.mxu0 0.0
    %291 = vmatpush1.msra.mxu0 0.0
    %292 = vmatprep.subr.mxu0 0.0
    %293 = vmatpush1.msra.mxu0 0.0
    %294 = vmatprep.subr.mxu0 0.0
    %295 = vmatpush1.msra.mxu0 0.0
    %296 = vmatprep.subr.mxu0 0.0
    %297 = vmatpush1.msra.mxu0 0.0
    %298 = vmatprep.subr.mxu0 0.0
    %299 = vmatpush1.msra.mxu0 0.0
    %300 = vmatprep.subr.mxu0 0.0
    %301 = vmatpush1.msra.mxu0 0.0
    %302 = vmatprep.subr.mxu0 0.0
    %303 = vmatpush1.msra.mxu0 0.0
    %304 = vmatprep.subr.mxu0 0.0
    %305 = vmatpush1.msra.mxu0 0.0
    %306 = vmatprep.mubr.f32.mxu0 0.0
    %307 = vmatmul.mubr.f32.gmra.mrb[0].mxu0 %v100
    %v308 = vpop.f32.mrb[0].mxu0
    %v309 = vadd.f32 0.0, %v308
    %v310 = vpop.f32.mrb[0].mxu0
    %311 = vdwg.mxu0
    %312 = vmatprep.subr.mxu0 0.0
    %313 = vmatpush1.msra.mxu0 %v79
    %314 = vmatprep.subr.mxu0 0.0
    %315 = vmatpush1.msra.mxu0 %v80
    %316 = vmatprep.subr.mxu0 0.0
    %317 = vmatpush1.msra.mxu0 %v81
    %318 = vmatprep.subr.mxu0 0.0
    %319 = vmatpush1.msra.mxu0 %v82
    %320 = vmatprep.subr.mxu0 0.0
    %321 = vmatpush1.msra.mxu0 0.0
    %322 = vmatprep.subr.mxu0 0.0
    %323 = vmatpush1.msra.mxu0 0.0
    %324 = vmatprep.subr.mxu0 0.0
    %325 = vmatpush1.msra.mxu0 0.0
    %326 = vmatprep.subr.mxu0 0.0
    %327 = vmatpush1.msra.mxu0 0.0
    %328 = vmatprep.subr.mxu0 0.0
    %329 = vmatpush1.msra.mxu0 0.0
    %330 = vmatprep.subr.mxu0 0.0
    %331 = vmatpush1.msra.mxu0 0.0
    %332 = vmatprep.subr.mxu0 0.0
    %333 = vmatpush1.msra.mxu0 0.0
    %334 = vmatprep.subr.mxu0 0.0
    %335 = vmatpush1.msra.mxu0 0.0
    %336 = vmatprep.subr.mxu0 0.0
    %337 = vmatpush1.msra.mxu0 0.0
    %338 = vmatprep.subr.mxu0 0.0
    %339 = vmatpush1.msra.mxu0 0.0
    %340 = vmatprep.subr.mxu0 0.0
    %341 = vmatpush1.msra.mxu0 0.0
    %342 = vmatprep.subr.mxu0 0.0
    %343 = vmatpush1.msra.mxu0 0.0
    %344 = vmatprep.subr.mxu0 0.0
    %345 = vmatpush1.msra.mxu0 0.0
    %346 = vmatprep.subr.mxu0 0.0
    %347 = vmatpush1.msra.mxu0 0.0
    %348 = vmatprep.subr.mxu0 0.0
    %349 = vmatpush1.msra.mxu0 0.0
    %350 = vmatprep.subr.mxu0 0.0
    %351 = vmatpush1.msra.mxu0 0.0
    %352 = vmatprep.subr.mxu0 0.0
    %353 = vmatpush1.msra.mxu0 0.0
    %354 = vmatprep.subr.mxu0 0.0
    %355 = vmatpush1.msra.mxu0 0.0
    %356 = vmatprep.subr.mxu0 0.0
    %357 = vmatpush1.msra.mxu0 0.0
    %358 = vmatprep.subr.mxu0 0.0
    %359 = vmatpush1.msra.mxu0 0.0
    %360 = vmatprep.subr.mxu0 0.0
    %361 = vmatpush1.msra.mxu0 0.0
    %362 = vmatprep.subr.mxu0 0.0
    %363 = vmatpush1.msra.mxu0 0.0
    %364 = vmatprep.subr.mxu0 0.0
    %365 = vmatpush1.msra.mxu0 0.0
    %366 = vmatprep.subr.mxu0 0.0
    %367 = vmatpush1.msra.mxu0 0.0
    %368 = vmatprep.subr.mxu0 0.0
    %369 = vmatpush1.msra.mxu0 0.0
    %370 = vmatprep.subr.mxu0 0.0
    %371 = vmatpush1.msra.mxu0 0.0
    %372 = vmatprep.subr.mxu0 0.0
    %373 = vmatpush1.msra.mxu0 0.0
    %374 = vmatprep.subr.mxu0 0.0
    %375 = vmatpush1.msra.mxu0 0.0
    %376 = vmatprep.mubr.f32.mxu0 0.0
    %377 = vmatmul.mubr.f32.gmra.mrb[0].mxu0 %v100
    %v378 = vpop.f32.mrb[0].mxu0
    %v379 = vadd.f32 0.0, %v378
    %v380 = vpop.f32.mrb[0].mxu0
    %381 = vdwg.mxu0
    %v383 = vsel %vm27, %v66, 0
    %385 = vmatprep.subr.mxu0 0.0
    %386 = vmatpush1.msra.mxu0 %v83
    %387 = vmatprep.subr.mxu0 0.0
    %388 = vmatpush1.msra.mxu0 %v84
    %389 = vmatprep.subr.mxu0 0.0
    %390 = vmatpush1.msra.mxu0 %v85
    %391 = vmatprep.subr.mxu0 0.0
    %392 = vmatpush1.msra.mxu0 %v86
    %393 = vmatprep.subr.mxu0 0.0
    %394 = vmatpush1.msra.mxu0 0.0
    %395 = vmatprep.subr.mxu0 0.0
    %396 = vmatpush1.msra.mxu0 0.0
    %397 = vmatprep.subr.mxu0 0.0
    %398 = vmatpush1.msra.mxu0 0.0
    %399 = vmatprep.subr.mxu0 0.0
    %400 = vmatpush1.msra.mxu0 0.0
    %401 = vmatprep.subr.mxu0 0.0
    %402 = vmatpush1.msra.mxu0 0.0
    %403 = vmatprep.subr.mxu0 0.0
    %404 = vmatpush1.msra.mxu0 0.0
    %405 = vmatprep.subr.mxu0 0.0
    %406 = vmatpush1.msra.mxu0 0.0
    %407 = vmatprep.subr.mxu0 0.0
    %408 = vmatpush1.msra.mxu0 0.0
    %409 = vmatprep.subr.mxu0 0.0
    %410 = vmatpush1.msra.mxu0 0.0
    %411 = vmatprep.subr.mxu0 0.0
    %412 = vmatpush1.msra.mxu0 0.0
    %413 = vmatprep.subr.mxu0 0.0
    %414 = vmatpush1.msra.mxu0 0.0
    %415 = vmatprep.subr.mxu0 0.0
    %416 = vmatpush1.msra.mxu0 0.0
    %417 = vmatprep.subr.mxu0 0.0
    %418 = vmatpush1.msra.mxu0 0.0
    %419 = vmatprep.subr.mxu0 0.0
    %420 = vmatpush1.msra.mxu0 0.0
    %421 = vmatprep.subr.mxu0 0.0
    %422 = vmatpush1.msra.mxu0 0.0
    %423 = vmatprep.subr.mxu0 0.0
    %424 = vmatpush1.msra.mxu0 0.0
    %425 = vmatprep.subr.mxu0 0.0
    %426 = vmatpush1.msra.mxu0 0.0
    %427 = vmatprep.subr.mxu0 0.0
    %428 = vmatpush1.msra.mxu0 0.0
    %429 = vmatprep.subr.mxu0 0.0
    %430 = vmatpush1.msra.mxu0 0.0
    %431 = vmatprep.subr.mxu0 0.0
    %432 = vmatpush1.msra.mxu0 0.0
    %433 = vmatprep.subr.mxu0 0.0
    %434 = vmatpush1.msra.mxu0 0.0
    %435 = vmatprep.subr.mxu0 0.0
    %436 = vmatpush1.msra.mxu0 0.0
    %437 = vmatprep.subr.mxu0 0.0
    %438 = vmatpush1.msra.mxu0 0.0
    %439 = vmatprep.subr.mxu0 0.0
    %440 = vmatpush1.msra.mxu0 0.0
    %441 = vmatprep.subr.mxu0 0.0
    %442 = vmatpush1.msra.mxu0 0.0
    %443 = vmatprep.subr.mxu0 0.0
    %444 = vmatpush1.msra.mxu0 0.0
    %445 = vmatprep.subr.mxu0 0.0
    %446 = vmatpush1.msra.mxu0 0.0
    %447 = vmatprep.subr.mxu0 0.0
    %448 = vmatpush1.msra.mxu0 0.0
    %449 = vmatprep.mubr.f32.mxu0 0.0
    %450 = vmatmul.mubr.f32.gmra.mrb[0].mxu0 %v383
    %v451 = vpop.f32.mrb[0].mxu0
    %v452 = vadd.f32 0.0, %v451
    %v453 = vpop.f32.mrb[0].mxu0
    %454 = vdwg.mxu0
    %455 = vmatprep.subr.mxu0 0.0
    %456 = vmatpush1.msra.mxu0 %v87
    %457 = vmatprep.subr.mxu0 0.0
    %458 = vmatpush1.msra.mxu0 %v88
    %459 = vmatprep.subr.mxu0 0.0
    %460 = vmatpush1.msra.mxu0 %v89
    %461 = vmatprep.subr.mxu0 0.0
    %462 = vmatpush1.msra.mxu0 %v90
    %463 = vmatprep.subr.mxu0 0.0
    %464 = vmatpush1.msra.mxu0 0.0
    %465 = vmatprep.subr.mxu0 0.0
    %466 = vmatpush1.msra.mxu0 0.0
    %467 = vmatprep.subr.mxu0 0.0
    %468 = vmatpush1.msra.mxu0 0.0
    %469 = vmatprep.subr.mxu0 0.0
    %470 = vmatpush1.msra.mxu0 0.0
    %471 = vmatprep.subr.mxu0 0.0
    %472 = vmatpush1.msra.mxu0 0.0
    %473 = vmatprep.subr.mxu0 0.0
    %474 = vmatpush1.msra.mxu0 0.0
    %475 = vmatprep.subr.mxu0 0.0
    %476 = vmatpush1.msra.mxu0 0.0
    %477 = vmatprep.subr.mxu0 0.0
    %478 = vmatpush1.msra.mxu0 0.0
    %479 = vmatprep.subr.mxu0 0.0
    %480 = vmatpush1.msra.mxu0 0.0
    %481 = vmatprep.subr.mxu0 0.0
    %482 = vmatpush1.msra.mxu0 0.0
    %483 = vmatprep.subr.mxu0 0.0
    %484 = vmatpush1.msra.mxu0 0.0
    %485 = vmatprep.subr.mxu0 0.0
    %486 = vmatpush1.msra.mxu0 0.0
    %487 = vmatprep.subr.mxu0 0.0
    %488 = vmatpush1.msra.mxu0 0.0
    %489 = vmatprep.subr.mxu0 0.0
    %490 = vmatpush1.msra.mxu0 0.0
    %491 = vmatprep.subr.mxu0 0.0
    %492 = vmatpush1.msra.mxu0 0.0
    %493 = vmatprep.subr.mxu0 0.0
    %494 = vmatpush1.msra.mxu0 0.0
    %495 = vmatprep.subr.mxu0 0.0
    %496 = vmatpush1.msra.mxu0 0.0
    %497 = vmatprep.subr.mxu0 0.0
    %498 = vmatpush1.msra.mxu0 0.0
    %499 = vmatprep.subr.mxu0 0.0
    %500 = vmatpush1.msra.mxu0 0.0
    %501 = vmatprep.subr.mxu0 0.0
    %502 = vmatpush1.msra.mxu0 0.0
    %503 = vmatprep.subr.mxu0 0.0
    %504 = vmatpush1.msra.mxu0 0.0
    %505 = vmatprep.subr.mxu0 0.0
    %506 = vmatpush1.msra.mxu0 0.0
    %507 = vmatprep.subr.mxu0 0.0
    %508 = vmatpush1.msra.mxu0 0.0
    %509 = vmatprep.subr.mxu0 0.0
    %510 = vmatpush1.msra.mxu0 0.0
    %511 = vmatprep.subr.mxu0 0.0
    %512 = vmatpush1.msra.mxu0 0.0
    %513 = vmatprep.subr.mxu0 0.0
    %514 = vmatpush1.msra.mxu0 0.0
    %515 = vmatprep.subr.mxu0 0.0
    %516 = vmatpush1.msra.mxu0 0.0
    %517 = vmatprep.subr.mxu0 0.0
    %518 = vmatpush1.msra.mxu0 0.0
    %519 = vmatprep.mubr.f32.mxu0 0.0
    %520 = vmatmul.mubr.f32.gmra.mrb[0].mxu0 %v383
    %v521 = vpop.f32.mrb[0].mxu0
    %v522 = vadd.f32 0.0, %v521
    %v523 = vpop.f32.mrb[0].mxu0
    %524 = vdwg.mxu0
    %525 = vmatprep.subr.mxu0 0.0
    %526 = vmatpush1.msra.mxu0 %v91
    %527 = vmatprep.subr.mxu0 0.0
    %528 = vmatpush1.msra.mxu0 %v92
    %529 = vmatprep.subr.mxu0 0.0
    %530 = vmatpush1.msra.mxu0 %v93
    %531 = vmatprep.subr.mxu0 0.0
    %532 = vmatpush1.msra.mxu0 %v94
    %533 = vmatprep.subr.mxu0 0.0
    %534 = vmatpush1.msra.mxu0 0.0
    %535 = vmatprep.subr.mxu0 0.0
    %536 = vmatpush1.msra.mxu0 0.0
    %537 = vmatprep.subr.mxu0 0.0
    %538 = vmatpush1.msra.mxu0 0.0
    %539 = vmatprep.subr.mxu0 0.0
    %540 = vmatpush1.msra.mxu0 0.0
    %541 = vmatprep.subr.mxu0 0.0
    %542 = vmatpush1.msra.mxu0 0.0
    %543 = vmatprep.subr.mxu0 0.0
    %544 = vmatpush1.msra.mxu0 0.0
    %545 = vmatprep.subr.mxu0 0.0
    %546 = vmatpush1.msra.mxu0 0.0
    %547 = vmatprep.subr.mxu0 0.0
    %548 = vmatpush1.msra.mxu0 0.0
    %549 = vmatprep.subr.mxu0 0.0
    %550 = vmatpush1.msra.mxu0 0.0
    %551 = vmatprep.subr.mxu0 0.0
    %552 = vmatpush1.msra.mxu0 0.0
    %553 = vmatprep.subr.mxu0 0.0
    %554 = vmatpush1.msra.mxu0 0.0
    %555 = vmatprep.subr.mxu0 0.0
    %556 = vmatpush1.msra.mxu0 0.0
    %557 = vmatprep.subr.mxu0 0.0
    %558 = vmatpush1.msra.mxu0 0.0
    %559 = vmatprep.subr.mxu0 0.0
    %560 = vmatpush1.msra.mxu0 0.0
    %561 = vmatprep.subr.mxu0 0.0
    %562 = vmatpush1.msra.mxu0 0.0
    %563 = vmatprep.subr.mxu0 0.0
    %564 = vmatpush1.msra.mxu0 0.0
    %565 = vmatprep.subr.mxu0 0.0
    %566 = vmatpush1.msra.mxu0 0.0
    %567 = vmatprep.subr.mxu0 0.0
    %568 = vmatpush1.msra.mxu0 0.0
    %569 = vmatprep.subr.mxu0 0.0
    %570 = vmatpush1.msra.mxu0 0.0
    %571 = vmatprep.subr.mxu0 0.0
    %572 = vmatpush1.msra.mxu0 0.0
    %573 = vmatprep.subr.mxu0 0.0
    %574 = vmatpush1.msra.mxu0 0.0
    %575 = vmatprep.subr.mxu0 0.0
    %576 = vmatpush1.msra.mxu0 0.0
    %577 = vmatprep.subr.mxu0 0.0
    %578 = vmatpush1.msra.mxu0 0.0
    %579 = vmatprep.subr.mxu0 0.0
    %580 = vmatpush1.msra.mxu0 0.0
    %581 = vmatprep.subr.mxu0 0.0
    %582 = vmatpush1.msra.mxu0 0.0
    %583 = vmatprep.subr.mxu0 0.0
    %584 = vmatpush1.msra.mxu0 0.0
    %585 = vmatprep.subr.mxu0 0.0
    %586 = vmatpush1.msra.mxu0 0.0
    %587 = vmatprep.subr.mxu0 0.0
    %588 = vmatpush1.msra.mxu0 0.0
    %589 = vmatprep.mubr.f32.mxu0 0.0
    %590 = vmatmul.mubr.f32.gmra.mrb[0].mxu0 %v383
    %v591 = vpop.f32.mrb[0].mxu0
    %v592 = vadd.f32 0.0, %v591
    %v593 = vpop.f32.mrb[0].mxu0
    %594 = vdwg.mxu0
    %595 = vmatprep.subr.mxu0 0.0
    %596 = vmatpush1.msra.mxu0 %v95
    %597 = vmatprep.subr.mxu0 0.0
    %598 = vmatpush1.msra.mxu0 %v96
    %599 = vmatprep.subr.mxu0 0.0
    %600 = vmatpush1.msra.mxu0 %v97
    %601 = vmatprep.subr.mxu0 0.0
    %602 = vmatpush1.msra.mxu0 %v98
    %603 = vmatprep.subr.mxu0 0.0
    %604 = vmatpush1.msra.mxu0 0.0
    %605 = vmatprep.subr.mxu0 0.0
    %606 = vmatpush1.msra.mxu0 0.0
    %607 = vmatprep.subr.mxu0 0.0
    %608 = vmatpush1.msra.mxu0 0.0
    %609 = vmatprep.subr.mxu0 0.0
    %610 = vmatpush1.msra.mxu0 0.0
    %611 = vmatprep.subr.mxu0 0.0
    %612 = vmatpush1.msra.mxu0 0.0
    %613 = vmatprep.subr.mxu0 0.0
    %614 = vmatpush1.msra.mxu0 0.0
    %615 = vmatprep.subr.mxu0 0.0
    %616 = vmatpush1.msra.mxu0 0.0
    %617 = vmatprep.subr.mxu0 0.0
    %618 = vmatpush1.msra.mxu0 0.0
    %619 = vmatprep.subr.mxu0 0.0
    %620 = vmatpush1.msra.mxu0 0.0
    %621 = vmatprep.subr.mxu0 0.0
    %622 = vmatpush1.msra.mxu0 0.0
    %623 = vmatprep.subr.mxu0 0.0
    %624 = vmatpush1.msra.mxu0 0.0
    %625 = vmatprep.subr.mxu0 0.0
    %626 = vmatpush1.msra.mxu0 0.0
    %627 = vmatprep.subr.mxu0 0.0
    %628 = vmatpush1.msra.mxu0 0.0
    %629 = vmatprep.subr.mxu0 0.0
    %630 = vmatpush1.msra.mxu0 0.0
    %631 = vmatprep.subr.mxu0 0.0
    %632 = vmatpush1.msra.mxu0 0.0
    %633 = vmatprep.subr.mxu0 0.0
    %634 = vmatpush1.msra.mxu0 0.0
    %635 = vmatprep.subr.mxu0 0.0
    %636 = vmatpush1.msra.mxu0 0.0
    %637 = vmatprep.subr.mxu0 0.0
    %638 = vmatpush1.msra.mxu0 0.0
    %639 = vmatprep.subr.mxu0 0.0
    %640 = vmatpush1.msra.mxu0 0.0
    %641 = vmatprep.subr.mxu0 0.0
    %642 = vmatpush1.msra.mxu0 0.0
    %643 = vmatprep.subr.mxu0 0.0
    %644 = vmatpush1.msra.mxu0 0.0
    %645 = vmatprep.subr.mxu0 0.0
    %646 = vmatpush1.msra.mxu0 0.0
    %647 = vmatprep.subr.mxu0 0.0
    %648 = vmatpush1.msra.mxu0 0.0
    %649 = vmatprep.subr.mxu0 0.0
    %650 = vmatpush1.msra.mxu0 0.0
    %651 = vmatprep.subr.mxu0 0.0
    %652 = vmatpush1.msra.mxu0 0.0
    %653 = vmatprep.subr.mxu0 0.0
    %654 = vmatpush1.msra.mxu0 0.0
    %655 = vmatprep.subr.mxu0 0.0
    %656 = vmatpush1.msra.mxu0 0.0
    %657 = vmatprep.subr.mxu0 0.0
    %658 = vmatpush1.msra.mxu0 0.0
    %659 = vmatprep.mubr.f32.mxu0 0.0
    %660 = vmatmul.mubr.f32.gmra.mrb[0].mxu0 %v383
    %v661 = vpop.f32.mrb[0].mxu0
    %v662 = vadd.f32 0.0, %v661
    %v663 = vpop.f32.mrb[0].mxu0
    %664 = vdwg.mxu0
    %666 = vrot.lane.b32.xlu0 %v169, 120
    %v667 = vpop.permute.xlu0 %666
    %vm668 = vcmask 64512
    %v669 = vsel %vm668, %v169, 0
    %v671 = vsel %vm668, %v667, 0
    %673 = vmatprep.subr.mxu0 0.0
    %674 = vmatpush1.xpose.msra.mxu0 %v671
    %675 = vmatprep.subr.mxu0 0.0
    %676 = vmatpush1.xpose.msra.mxu0 0.0
    %677 = vmatprep.subr.mxu0 0.0
    %678 = vmatpush1.xpose.msra.mxu0 0.0
    %679 = vmatprep.subr.mxu0 0.0
    %680 = vmatpush1.xpose.msra.mxu0 0.0
    %681 = vmatprep.subr.mxu0 0.0
    %682 = vmatpush1.xpose.msra.mxu0 0.0
    %683 = vmatprep.subr.mxu0 0.0
    %684 = vmatpush1.xpose.msra.mxu0 0.0
    %685 = vmatprep.subr.mxu0 0.0
    %686 = vmatpush1.xpose.msra.mxu0 0.0
    %687 = vmatprep.subr.mxu0 0.0
    %688 = vmatpush1.xpose.msra.mxu0 0.0
    %689 = vmatprep.subr.mxu0 0.0
    %690 = vmatpush1.xpose.msra.mxu0 0.0
    %691 = vmatprep.subr.mxu0 0.0
    %692 = vmatpush1.xpose.msra.mxu0 0.0
    %693 = vmatprep.subr.mxu0 0.0
    %694 = vmatpush1.xpose.msra.mxu0 0.0
    %695 = vmatprep.subr.mxu0 0.0
    %696 = vmatpush1.xpose.msra.mxu0 0.0
    %697 = vmatprep.subr.mxu0 0.0
    %698 = vmatpush1.xpose.msra.mxu0 0.0
    %699 = vmatprep.subr.mxu0 0.0
    %700 = vmatpush1.xpose.msra.mxu0 0.0
    %701 = vmatprep.subr.mxu0 0.0
    %702 = vmatpush1.xpose.msra.mxu0 0.0
    %703 = vmatprep.subr.mxu0 0.0
    %704 = vmatpush1.xpose.msra.mxu0 0.0
    %705 = vmatprep.subr.mxu0 0.0
    %706 = vmatpush1.xpose.msra.mxu0 0.0
    %707 = vmatprep.subr.mxu0 0.0
    %708 = vmatpush1.xpose.msra.mxu0 0.0
    %709 = vmatprep.subr.mxu0 0.0
    %710 = vmatpush1.xpose.msra.mxu0 0.0
    %711 = vmatprep.subr.mxu0 0.0
    %712 = vmatpush1.xpose.msra.mxu0 0.0
    %713 = vmatprep.subr.mxu0 0.0
    %714 = vmatpush1.xpose.msra.mxu0 0.0
    %715 = vmatprep.subr.mxu0 0.0
    %716 = vmatpush1.xpose.msra.mxu0 0.0
    %717 = vmatprep.subr.mxu0 0.0
    %718 = vmatpush1.xpose.msra.mxu0 0.0
    %719 = vmatprep.subr.mxu0 0.0
    %720 = vmatpush1.xpose.msra.mxu0 0.0
    %721 = vmatprep.subr.mxu0 0.0
    %722 = vmatpush1.xpose.msra.mxu0 0.0
    %723 = vmatprep.subr.mxu0 0.0
    %724 = vmatpush1.xpose.msra.mxu0 0.0
    %725 = vmatprep.subr.mxu0 0.0
    %726 = vmatpush1.xpose.msra.mxu0 0.0
    %727 = vmatprep.subr.mxu0 0.0
    %728 = vmatpush1.xpose.msra.mxu0 0.0
    %729 = vmatprep.subr.mxu0 0.0
    %730 = vmatpush1.xpose.msra.mxu0 0.0
    %731 = vmatprep.subr.mxu0 0.0
    %732 = vmatpush1.xpose.msra.mxu0 0.0
    %733 = vmatprep.subr.mxu0 0.0
    %734 = vmatpush1.xpose.msra.mxu0 0.0
    %735 = vmatprep.subr.mxu0 0.0
    %736 = vmatpush1.xpose.msra.mxu0 0.0
    %737 = vmatprep.mubr.f32.mxu0 0.0
    %738 = vmatmul.mubr.f32.gmra.mrb[0].mxu0 %v669
    %v739 = vpop.f32.mrb[0].mxu0
    %v740 = vadd.f32 0.0, %v739
    %v741 = vpop.f32.mrb[0].mxu0
    %742 = vdwg.mxu0
    %744 = vrot.lane.b32.xlu0 %v239, 120
    %v745 = vpop.permute.xlu0 %744
    %v746 = vsel %vm668, %v239, 0
    %v748 = vsel %vm668, %v745, 0
    %750 = vmatprep.subr.mxu0 0.0
    %751 = vmatpush1.xpose.msra.mxu0 %v748
    %752 = vmatprep.subr.mxu0 0.0
    %753 = vmatpush1.xpose.msra.mxu0 0.0
    %754 = vmatprep.subr.mxu0 0.0
    %755 = vmatpush1.xpose.msra.mxu0 0.0
    %756 = vmatprep.subr.mxu0 0.0
    %757 = vmatpush1.xpose.msra.mxu0 0.0
    %758 = vmatprep.subr.mxu0 0.0
    %759 = vmatpush1.xpose.msra.mxu0 0.0
    %760 = vmatprep.subr.mxu0 0.0
    %761 = vmatpush1.xpose.msra.mxu0 0.0
    %762 = vmatprep.subr.mxu0 0.0
    %763 = vmatpush1.xpose.msra.mxu0 0.0
    %764 = vmatprep.subr.mxu0 0.0
    %765 = vmatpush1.xpose.msra.mxu0 0.0
    %766 = vmatprep.subr.mxu0 0.0
    %767 = vmatpush1.xpose.msra.mxu0 0.0
    %768 = vmatprep.subr.mxu0 0.0
    %769 = vmatpush1.xpose.msra.mxu0 0.0
    %770 = vmatprep.subr.mxu0 0.0
    %771 = vmatpush1.xpose.msra.mxu0 0.0
    %772 = vmatprep.subr.mxu0 0.0
    %773 = vmatpush1.xpose.msra.mxu0 0.0
    %774 = vmatprep.subr.mxu0 0.0
    %775 = vmatpush1.xpose.msra.mxu0 0.0
    %776 = vmatprep.subr.mxu0 0.0
    %777 = vmatpush1.xpose.msra.mxu0 0.0
    %778 = vmatprep.subr.mxu0 0.0
    %779 = vmatpush1.xpose.msra.mxu0 0.0
    %780 = vmatprep.subr.mxu0 0.0
    %781 = vmatpush1.xpose.msra.mxu0 0.0
    %782 = vmatprep.subr.mxu0 0.0
    %783 = vmatpush1.xpose.msra.mxu0 0.0
    %784 = vmatprep.subr.mxu0 0.0
    %785 = vmatpush1.xpose.msra.mxu0 0.0
    %786 = vmatprep.subr.mxu0 0.0
    %787 = vmatpush1.xpose.msra.mxu0 0.0
    %788 = vmatprep.subr.mxu0 0.0
    %789 = vmatpush1.xpose.msra.mxu0 0.0
    %790 = vmatprep.subr.mxu0 0.0
    %791 = vmatpush1.xpose.msra.mxu0 0.0
    %792 = vmatprep.subr.mxu0 0.0
    %793 = vmatpush1.xpose.msra.mxu0 0.0
    %794 = vmatprep.subr.mxu0 0.0
    %795 = vmatpush1.xpose.msra.mxu0 0.0
    %796 = vmatprep.subr.mxu0 0.0
    %797 = vmatpush1.xpose.msra.mxu0 0.0
    %798 = vmatprep.subr.mxu0 0.0
    %799 = vmatpush1.xpose.msra.mxu0 0.0
    %800 = vmatprep.subr.mxu0 0.0
    %801 = vmatpush1.xpose.msra.mxu0 0.0
    %802 = vmatprep.subr.mxu0 0.0
    %803 = vmatpush1.xpose.msra.mxu0 0.0
    %804 = vmatprep.subr.mxu0 0.0
    %805 = vmatpush1.xpose.msra.mxu0 0.0
    %806 = vmatprep.subr.mxu0 0.0
    %807 = vmatpush1.xpose.msra.mxu0 0.0
    %808 = vmatprep.subr.mxu0 0.0
    %809 = vmatpush1.xpose.msra.mxu0 0.0
    %810 = vmatprep.subr.mxu0 0.0
    %811 = vmatpush1.xpose.msra.mxu0 0.0
    %812 = vmatprep.subr.mxu0 0.0
    %813 = vmatpush1.xpose.msra.mxu0 0.0
    %814 = vmatprep.mubr.f32.mxu0 0.0
    %815 = vmatmul.mubr.f32.gmra.mrb[0].mxu0 %v746
    %v816 = vpop.f32.mrb[0].mxu0
    %v817 = vadd.f32 0.0, %v816
    %v818 = vpop.f32.mrb[0].mxu0
    %819 = vdwg.mxu0
    %821 = vrot.lane.b32.xlu0 %v309, 120
    %v822 = vpop.permute.xlu0 %821
    %v823 = vsel %vm668, %v309, 0
    %v825 = vsel %vm668, %v822, 0
    %827 = vmatprep.subr.mxu0 0.0
    %828 = vmatpush1.xpose.msra.mxu0 %v825
    %829 = vmatprep.subr.mxu0 0.0
    %830 = vmatpush1.xpose.msra.mxu0 0.0
    %831 = vmatprep.subr.mxu0 0.0
    %832 = vmatpush1.xpose.msra.mxu0 0.0
    %833 = vmatprep.subr.mxu0 0.0
    %834 = vmatpush1.xpose.msra.mxu0 0.0
    %835 = vmatprep.subr.mxu0 0.0
    %836 = vmatpush1.xpose.msra.mxu0 0.0
    %837 = vmatprep.subr.mxu0 0.0
    %838 = vmatpush1.xpose.msra.mxu0 0.0
    %839 = vmatprep.subr.mxu0 0.0
    %840 = vmatpush1.xpose.msra.mxu0 0.0
    %841 = vmatprep.subr.mxu0 0.0
    %842 = vmatpush1.xpose.msra.mxu0 0.0
    %843 = vmatprep.subr.mxu0 0.0
    %844 = vmatpush1.xpose.msra.mxu0 0.0
    %845 = vmatprep.subr.mxu0 0.0
    %846 = vmatpush1.xpose.msra.mxu0 0.0
    %847 = vmatprep.subr.mxu0 0.0
    %848 = vmatpush1.xpose.msra.mxu0 0.0
    %849 = vmatprep.subr.mxu0 0.0
    %850 = vmatpush1.xpose.msra.mxu0 0.0
    %851 = vmatprep.subr.mxu0 0.0
    %852 = vmatpush1.xpose.msra.mxu0 0.0
    %853 = vmatprep.subr.mxu0 0.0
    %854 = vmatpush1.xpose.msra.mxu0 0.0
    %855 = vmatprep.subr.mxu0 0.0
    %856 = vmatpush1.xpose.msra.mxu0 0.0
    %857 = vmatprep.subr.mxu0 0.0
    %858 = vmatpush1.xpose.msra.mxu0 0.0
    %859 = vmatprep.subr.mxu0 0.0
    %860 = vmatpush1.xpose.msra.mxu0 0.0
    %861 = vmatprep.subr.mxu0 0.0
    %862 = vmatpush1.xpose.msra.mxu0 0.0
    %863 = vmatprep.subr.mxu0 0.0
    %864 = vmatpush1.xpose.msra.mxu0 0.0
    %865 = vmatprep.subr.mxu0 0.0
    %866 = vmatpush1.xpose.msra.mxu0 0.0
    %867 = vmatprep.subr.mxu0 0.0
    %868 = vmatpush1.xpose.msra.mxu0 0.0
    %869 = vmatprep.subr.mxu0 0.0
    %870 = vmatpush1.xpose.msra.mxu0 0.0
    %871 = vmatprep.subr.mxu0 0.0
    %872 = vmatpush1.xpose.msra.mxu0 0.0
    %873 = vmatprep.subr.mxu0 0.0
    %874 = vmatpush1.xpose.msra.mxu0 0.0
    %875 = vmatprep.subr.mxu0 0.0
    %876 = vmatpush1.xpose.msra.mxu0 0.0
    %877 = vmatprep.subr.mxu0 0.0
    %878 = vmatpush1.xpose.msra.mxu0 0.0
    %879 = vmatprep.subr.mxu0 0.0
    %880 = vmatpush1.xpose.msra.mxu0 0.0
    %881 = vmatprep.subr.mxu0 0.0
    %882 = vmatpush1.xpose.msra.mxu0 0.0
    %883 = vmatprep.subr.mxu0 0.0
    %884 = vmatpush1.xpose.msra.mxu0 0.0
    %885 = vmatprep.subr.mxu0 0.0
    %886 = vmatpush1.xpose.msra.mxu0 0.0
    %887 = vmatprep.subr.mxu0 0.0
    %888 = vmatpush1.xpose.msra.mxu0 0.0
    %889 = vmatprep.subr.mxu0 0.0
    %890 = vmatpush1.xpose.msra.mxu0 0.0
    %891 = vmatprep.mubr.f32.mxu0 0.0
    %892 = vmatmul.mubr.f32.gmra.mrb[0].mxu0 %v823
    %v893 = vpop.f32.mrb[0].mxu0
    %v894 = vadd.f32 0.0, %v893
    %v895 = vpop.f32.mrb[0].mxu0
    %896 = vdwg.mxu0
    %898 = vrot.lane.b32.xlu0 %v379, 120
    %v899 = vpop.permute.xlu0 %898
    %v900 = vsel %vm668, %v379, 0
    %v902 = vsel %vm668, %v899, 0
    %904 = vmatprep.subr.mxu0 0.0
    %905 = vmatpush1.xpose.msra.mxu0 %v902
    %906 = vmatprep.subr.mxu0 0.0
    %907 = vmatpush1.xpose.msra.mxu0 0.0
    %908 = vmatprep.subr.mxu0 0.0
    %909 = vmatpush1.xpose.msra.mxu0 0.0
    %910 = vmatprep.subr.mxu0 0.0
    %911 = vmatpush1.xpose.msra.mxu0 0.0
    %912 = vmatprep.subr.mxu0 0.0
    %913 = vmatpush1.xpose.msra.mxu0 0.0
    %914 = vmatprep.subr.mxu0 0.0
    %915 = vmatpush1.xpose.msra.mxu0 0.0
    %916 = vmatprep.subr.mxu0 0.0
    %917 = vmatpush1.xpose.msra.mxu0 0.0
    %918 = vmatprep.subr.mxu0 0.0
    %919 = vmatpush1.xpose.msra.mxu0 0.0
    %920 = vmatprep.subr.mxu0 0.0
    %921 = vmatpush1.xpose.msra.mxu0 0.0
    %922 = vmatprep.subr.mxu0 0.0
    %923 = vmatpush1.xpose.msra.mxu0 0.0
    %924 = vmatprep.subr.mxu0 0.0
    %925 = vmatpush1.xpose.msra.mxu0 0.0
    %926 = vmatprep.subr.mxu0 0.0
    %927 = vmatpush1.xpose.msra.mxu0 0.0
    %928 = vmatprep.subr.mxu0 0.0
    %929 = vmatpush1.xpose.msra.mxu0 0.0
    %930 = vmatprep.subr.mxu0 0.0
    %931 = vmatpush1.xpose.msra.mxu0 0.0
    %932 = vmatprep.subr.mxu0 0.0
    %933 = vmatpush1.xpose.msra.mxu0 0.0
    %934 = vmatprep.subr.mxu0 0.0
    %935 = vmatpush1.xpose.msra.mxu0 0.0
    %936 = vmatprep.subr.mxu0 0.0
    %937 = vmatpush1.xpose.msra.mxu0 0.0
    %938 = vmatprep.subr.mxu0 0.0
    %939 = vmatpush1.xpose.msra.mxu0 0.0
    %940 = vmatprep.subr.mxu0 0.0
    %941 = vmatpush1.xpose.msra.mxu0 0.0
    %942 = vmatprep.subr.mxu0 0.0
    %943 = vmatpush1.xpose.msra.mxu0 0.0
    %944 = vmatprep.subr.mxu0 0.0
    %945 = vmatpush1.xpose.msra.mxu0 0.0
    %946 = vmatprep.subr.mxu0 0.0
    %947 = vmatpush1.xpose.msra.mxu0 0.0
    %948 = vmatprep.subr.mxu0 0.0
    %949 = vmatpush1.xpose.msra.mxu0 0.0
    %950 = vmatprep.subr.mxu0 0.0
    %951 = vmatpush1.xpose.msra.mxu0 0.0
    %952 = vmatprep.subr.mxu0 0.0
    %953 = vmatpush1.xpose.msra.mxu0 0.0
    %954 = vmatprep.subr.mxu0 0.0
    %955 = vmatpush1.xpose.msra.mxu0 0.0
    %956 = vmatprep.subr.mxu0 0.0
    %957 = vmatpush1.xpose.msra.mxu0 0.0
    %958 = vmatprep.subr.mxu0 0.0
    %959 = vmatpush1.xpose.msra.mxu0 0.0
    %960 = vmatprep.subr.mxu0 0.0
    %961 = vmatpush1.xpose.msra.mxu0 0.0
    %962 = vmatprep.subr.mxu0 0.0
    %963 = vmatpush1.xpose.msra.mxu0 0.0
    %964 = vmatprep.subr.mxu0 0.0
    %965 = vmatpush1.xpose.msra.mxu0 0.0
    %966 = vmatprep.subr.mxu0 0.0
    %967 = vmatpush1.xpose.msra.mxu0 0.0
    %968 = vmatprep.mubr.f32.mxu0 0.0
    %969 = vmatmul.mubr.f32.gmra.mrb[0].mxu0 %v900
    %v970 = vpop.f32.mrb[0].mxu0
    %v971 = vadd.f32 0.0, %v970
    %v972 = vpop.f32.mrb[0].mxu0
    %973 = vdwg.mxu0
    %975 = vrot.lane.b32.xlu0 %v452, 120
    %v976 = vpop.permute.xlu0 %975
    %v977 = vsel %vm668, %v452, 0
    %v979 = vsel %vm668, %v976, 0
    %981 = vmatprep.subr.mxu0 0.0
    %982 = vmatpush1.xpose.msra.mxu0 %v979
    %983 = vmatprep.subr.mxu0 0.0
    %984 = vmatpush1.xpose.msra.mxu0 0.0
    %985 = vmatprep.subr.mxu0 0.0
    %986 = vmatpush1.xpose.msra.mxu0 0.0
    %987 = vmatprep.subr.mxu0 0.0
    %988 = vmatpush1.xpose.msra.mxu0 0.0
    %989 = vmatprep.subr.mxu0 0.0
    %990 = vmatpush1.xpose.msra.mxu0 0.0
    %991 = vmatprep.subr.mxu0 0.0
    %992 = vmatpush1.xpose.msra.mxu0 0.0
    %993 = vmatprep.subr.mxu0 0.0
    %994 = vmatpush1.xpose.msra.mxu0 0.0
    %995 = vmatprep.subr.mxu0 0.0
    %996 = vmatpush1.xpose.msra.mxu0 0.0
    %997 = vmatprep.subr.mxu0 0.0
    %998 = vmatpush1.xpose.msra.mxu0 0.0
    %999 = vmatprep.subr.mxu0 0.0
    %1000 = vmatpush1.xpose.msra.mxu0 0.0
    %1001 = vmatprep.subr.mxu0 0.0
    %1002 = vmatpush1.xpose.msra.mxu0 0.0
    %1003 = vmatprep.subr.mxu0 0.0
    %1004 = vmatpush1.xpose.msra.mxu0 0.0
    %1005 = vmatprep.subr.mxu0 0.0
    %1006 = vmatpush1.xpose.msra.mxu0 0.0
    %1007 = vmatprep.subr.mxu0 0.0
    %1008 = vmatpush1.xpose.msra.mxu0 0.0
    %1009 = vmatprep.subr.mxu0 0.0
    %1010 = vmatpush1.xpose.msra.mxu0 0.0
    %1011 = vmatprep.subr.mxu0 0.0
    %1012 = vmatpush1.xpose.msra.mxu0 0.0
    %1013 = vmatprep.subr.mxu0 0.0
    %1014 = vmatpush1.xpose.msra.mxu0 0.0
    %1015 = vmatprep.subr.mxu0 0.0
    %1016 = vmatpush1.xpose.msra.mxu0 0.0
    %1017 = vmatprep.subr.mxu0 0.0
    %1018 = vmatpush1.xpose.msra.mxu0 0.0
    %1019 = vmatprep.subr.mxu0 0.0
    %1020 = vmatpush1.xpose.msra.mxu0 0.0
    %1021 = vmatprep.subr.mxu0 0.0
    %1022 = vmatpush1.xpose.msra.mxu0 0.0
    %1023 = vmatprep.subr.mxu0 0.0
    %1024 = vmatpush1.xpose.msra.mxu0 0.0
    %1025 = vmatprep.subr.mxu0 0.0
    %1026 = vmatpush1.xpose.msra.mxu0 0.0
    %1027 = vmatprep.subr.mxu0 0.0
    %1028 = vmatpush1.xpose.msra.mxu0 0.0
    %1029 = vmatprep.subr.mxu0 0.0
    %1030 = vmatpush1.xpose.msra.mxu0 0.0
    %1031 = vmatprep.subr.mxu0 0.0
    %1032 = vmatpush1.xpose.msra.mxu0 0.0
    %1033 = vmatprep.subr.mxu0 0.0
    %1034 = vmatpush1.xpose.msra.mxu0 0.0
    %1035 = vmatprep.subr.mxu0 0.0
    %1036 = vmatpush1.xpose.msra.mxu0 0.0
    %1037 = vmatprep.subr.mxu0 0.0
    %1038 = vmatpush1.xpose.msra.mxu0 0.0
    %1039 = vmatprep.subr.mxu0 0.0
    %1040 = vmatpush1.xpose.msra.mxu0 0.0
    %1041 = vmatprep.subr.mxu0 0.0
    %1042 = vmatpush1.xpose.msra.mxu0 0.0
    %1043 = vmatprep.subr.mxu0 0.0
    %1044 = vmatpush1.xpose.msra.mxu0 0.0
    %1045 = vmatprep.mubr.f32.mxu0 0.0
    %1046 = vmatmul.mubr.f32.gmra.mrb[0].mxu0 %v977
    %v1047 = vpop.f32.mrb[0].mxu0
    %v1048 = vadd.f32 0.0, %v1047
    %v1049 = vpop.f32.mrb[0].mxu0
    %1050 = vdwg.mxu0
    %1052 = vrot.lane.b32.xlu0 %v522, 120
    %v1053 = vpop.permute.xlu0 %1052
    %v1054 = vsel %vm668, %v522, 0
    %v1056 = vsel %vm668, %v1053, 0
    %1058 = vmatprep.subr.mxu0 0.0
    %1059 = vmatpush1.xpose.msra.mxu0 %v1056
    %1060 = vmatprep.subr.mxu0 0.0
    %1061 = vmatpush1.xpose.msra.mxu0 0.0
    %1062 = vmatprep.subr.mxu0 0.0
    %1063 = vmatpush1.xpose.msra.mxu0 0.0
    %1064 = vmatprep.subr.mxu0 0.0
    %1065 = vmatpush1.xpose.msra.mxu0 0.0
    %1066 = vmatprep.subr.mxu0 0.0
    %1067 = vmatpush1.xpose.msra.mxu0 0.0
    %1068 = vmatprep.subr.mxu0 0.0
    %1069 = vmatpush1.xpose.msra.mxu0 0.0
    %1070 = vmatprep.subr.mxu0 0.0
    %1071 = vmatpush1.xpose.msra.mxu0 0.0
    %1072 = vmatprep.subr.mxu0 0.0
    %1073 = vmatpush1.xpose.msra.mxu0 0.0
    %1074 = vmatprep.subr.mxu0 0.0
    %1075 = vmatpush1.xpose.msra.mxu0 0.0
    %1076 = vmatprep.subr.mxu0 0.0
    %1077 = vmatpush1.xpose.msra.mxu0 0.0
    %1078 = vmatprep.subr.mxu0 0.0
    %1079 = vmatpush1.xpose.msra.mxu0 0.0
    %1080 = vmatprep.subr.mxu0 0.0
    %1081 = vmatpush1.xpose.msra.mxu0 0.0
    %1082 = vmatprep.subr.mxu0 0.0
    %1083 = vmatpush1.xpose.msra.mxu0 0.0
    %1084 = vmatprep.subr.mxu0 0.0
    %1085 = vmatpush1.xpose.msra.mxu0 0.0
    %1086 = vmatprep.subr.mxu0 0.0
    %1087 = vmatpush1.xpose.msra.mxu0 0.0
    %1088 = vmatprep.subr.mxu0 0.0
    %1089 = vmatpush1.xpose.msra.mxu0 0.0
    %1090 = vmatprep.subr.mxu0 0.0
    %1091 = vmatpush1.xpose.msra.mxu0 0.0
    %1092 = vmatprep.subr.mxu0 0.0
    %1093 = vmatpush1.xpose.msra.mxu0 0.0
    %1094 = vmatprep.subr.mxu0 0.0
    %1095 = vmatpush1.xpose.msra.mxu0 0.0
    %1096 = vmatprep.subr.mxu0 0.0
    %1097 = vmatpush1.xpose.msra.mxu0 0.0
    %1098 = vmatprep.subr.mxu0 0.0
    %1099 = vmatpush1.xpose.msra.mxu0 0.0
    %1100 = vmatprep.subr.mxu0 0.0
    %1101 = vmatpush1.xpose.msra.mxu0 0.0
    %1102 = vmatprep.subr.mxu0 0.0
    %1103 = vmatpush1.xpose.msra.mxu0 0.0
    %1104 = vmatprep.subr.mxu0 0.0
    %1105 = vmatpush1.xpose.msra.mxu0 0.0
    %1106 = vmatprep.subr.mxu0 0.0
    %1107 = vmatpush1.xpose.msra.mxu0 0.0
    %1108 = vmatprep.subr.mxu0 0.0
    %1109 = vmatpush1.xpose.msra.mxu0 0.0
    %1110 = vmatprep.subr.mxu0 0.0
    %1111 = vmatpush1.xpose.msra.mxu0 0.0
    %1112 = vmatprep.subr.mxu0 0.0
    %1113 = vmatpush1.xpose.msra.mxu0 0.0
    %1114 = vmatprep.subr.mxu0 0.0
    %1115 = vmatpush1.xpose.msra.mxu0 0.0
    %1116 = vmatprep.subr.mxu0 0.0
    %1117 = vmatpush1.xpose.msra.mxu0 0.0
    %1118 = vmatprep.subr.mxu0 0.0
    %1119 = vmatpush1.xpose.msra.mxu0 0.0
    %1120 = vmatprep.subr.mxu0 0.0
    %1121 = vmatpush1.xpose.msra.mxu0 0.0
    %1122 = vmatprep.mubr.f32.mxu0 0.0
    %1123 = vmatmul.mubr.f32.gmra.mrb[0].mxu0 %v1054
    %v1124 = vpop.f32.mrb[0].mxu0
    %v1125 = vadd.f32 0.0, %v1124
    %v1126 = vpop.f32.mrb[0].mxu0
    %1127 = vdwg.mxu0
    %1129 = vrot.lane.b32.xlu0 %v592, 120
    %v1130 = vpop.permute.xlu0 %1129
    %v1131 = vsel %vm668, %v592, 0
    %v1133 = vsel %vm668, %v1130, 0
    %1135 = vmatprep.subr.mxu0 0.0
    %1136 = vmatpush1.xpose.msra.mxu0 %v1133
    %1137 = vmatprep.subr.mxu0 0.0
    %1138 = vmatpush1.xpose.msra.mxu0 0.0
    %1139 = vmatprep.subr.mxu0 0.0
    %1140 = vmatpush1.xpose.msra.mxu0 0.0
    %1141 = vmatprep.subr.mxu0 0.0
    %1142 = vmatpush1.xpose.msra.mxu0 0.0
    %1143 = vmatprep.subr.mxu0 0.0
    %1144 = vmatpush1.xpose.msra.mxu0 0.0
    %1145 = vmatprep.subr.mxu0 0.0
    %1146 = vmatpush1.xpose.msra.mxu0 0.0
    %1147 = vmatprep.subr.mxu0 0.0
    %1148 = vmatpush1.xpose.msra.mxu0 0.0
    %1149 = vmatprep.subr.mxu0 0.0
    %1150 = vmatpush1.xpose.msra.mxu0 0.0
    %1151 = vmatprep.subr.mxu0 0.0
    %1152 = vmatpush1.xpose.msra.mxu0 0.0
    %1153 = vmatprep.subr.mxu0 0.0
    %1154 = vmatpush1.xpose.msra.mxu0 0.0
    %1155 = vmatprep.subr.mxu0 0.0
    %1156 = vmatpush1.xpose.msra.mxu0 0.0
    %1157 = vmatprep.subr.mxu0 0.0
    %1158 = vmatpush1.xpose.msra.mxu0 0.0
    %1159 = vmatprep.subr.mxu0 0.0
    %1160 = vmatpush1.xpose.msra.mxu0 0.0
    %1161 = vmatprep.subr.mxu0 0.0
    %1162 = vmatpush1.xpose.msra.mxu0 0.0
    %1163 = vmatprep.subr.mxu0 0.0
    %1164 = vmatpush1.xpose.msra.mxu0 0.0
    %1165 = vmatprep.subr.mxu0 0.0
    %1166 = vmatpush1.xpose.msra.mxu0 0.0
    %1167 = vmatprep.subr.mxu0 0.0
    %1168 = vmatpush1.xpose.msra.mxu0 0.0
    %1169 = vmatprep.subr.mxu0 0.0
    %1170 = vmatpush1.xpose.msra.mxu0 0.0
    %1171 = vmatprep.subr.mxu0 0.0
    %1172 = vmatpush1.xpose.msra.mxu0 0.0
    %1173 = vmatprep.subr.mxu0 0.0
    %1174 = vmatpush1.xpose.msra.mxu0 0.0
    %1175 = vmatprep.subr.mxu0 0.0
    %1176 = vmatpush1.xpose.msra.mxu0 0.0
    %1177 = vmatprep.subr.mxu0 0.0
    %1178 = vmatpush1.xpose.msra.mxu0 0.0
    %1179 = vmatprep.subr.mxu0 0.0
    %1180 = vmatpush1.xpose.msra.mxu0 0.0
    %1181 = vmatprep.subr.mxu0 0.0
    %1182 = vmatpush1.xpose.msra.mxu0 0.0
    %1183 = vmatprep.subr.mxu0 0.0
    %1184 = vmatpush1.xpose.msra.mxu0 0.0
    %1185 = vmatprep.subr.mxu0 0.0
    %1186 = vmatpush1.xpose.msra.mxu0 0.0
    %1187 = vmatprep.subr.mxu0 0.0
    %1188 = vmatpush1.xpose.msra.mxu0 0.0
    %1189 = vmatprep.subr.mxu0 0.0
    %1190 = vmatpush1.xpose.msra.mxu0 0.0
    %1191 = vmatprep.subr.mxu0 0.0
    %1192 = vmatpush1.xpose.msra.mxu0 0.0
    %1193 = vmatprep.subr.mxu0 0.0
    %1194 = vmatpush1.xpose.msra.mxu0 0.0
    %1195 = vmatprep.subr.mxu0 0.0
    %1196 = vmatpush1.xpose.msra.mxu0 0.0
    %1197 = vmatprep.subr.mxu0 0.0
    %1198 = vmatpush1.xpose.msra.mxu0 0.0
    %1199 = vmatprep.mubr.f32.mxu0 0.0
    %1200 = vmatmul.mubr.f32.gmra.mrb[0].mxu0 %v1131
    %v1201 = vpop.f32.mrb[0].mxu0
    %v1202 = vadd.f32 0.0, %v1201
    %v1203 = vpop.f32.mrb[0].mxu0
    %1204 = vdwg.mxu0
    %1206 = vrot.lane.b32.xlu0 %v662, 120
    %v1207 = vpop.permute.xlu0 %1206
    %v1208 = vsel %vm668, %v662, 0
    %v1210 = vsel %vm668, %v1207, 0
    %1212 = vmatprep.subr.mxu0 0.0
    %1213 = vmatpush1.xpose.msra.mxu0 %v1210
    %1214 = vmatprep.subr.mxu0 0.0
    %1215 = vmatpush1.xpose.msra.mxu0 0.0
    %1216 = vmatprep.subr.mxu0 0.0
    %1217 = vmatpush1.xpose.msra.mxu0 0.0
    %1218 = vmatprep.subr.mxu0 0.0
    %1219 = vmatpush1.xpose.msra.mxu0 0.0
    %1220 = vmatprep.subr.mxu0 0.0
    %1221 = vmatpush1.xpose.msra.mxu0 0.0
    %1222 = vmatprep.subr.mxu0 0.0
    %1223 = vmatpush1.xpose.msra.mxu0 0.0
    %1224 = vmatprep.subr.mxu0 0.0
    %1225 = vmatpush1.xpose.msra.mxu0 0.0
    %1226 = vmatprep.subr.mxu0 0.0
    %1227 = vmatpush1.xpose.msra.mxu0 0.0
    %1228 = vmatprep.subr.mxu0 0.0
    %1229 = vmatpush1.xpose.msra.mxu0 0.0
    %1230 = vmatprep.subr.mxu0 0.0
    %1231 = vmatpush1.xpose.msra.mxu0 0.0
    %1232 = vmatprep.subr.mxu0 0.0
    %1233 = vmatpush1.xpose.msra.mxu0 0.0
    %1234 = vmatprep.subr.mxu0 0.0
    %1235 = vmatpush1.xpose.msra.mxu0 0.0
    %1236 = vmatprep.subr.mxu0 0.0
    %1237 = vmatpush1.xpose.msra.mxu0 0.0
    %1238 = vmatprep.subr.mxu0 0.0
    %1239 = vmatpush1.xpose.msra.mxu0 0.0
    %1240 = vmatprep.subr.mxu0 0.0
    %1241 = vmatpush1.xpose.msra.mxu0 0.0
    %1242 = vmatprep.subr.mxu0 0.0
    %1243 = vmatpush1.xpose.msra.mxu0 0.0
    %1244 = vmatprep.subr.mxu0 0.0
    %1245 = vmatpush1.xpose.msra.mxu0 0.0
    %1246 = vmatprep.subr.mxu0 0.0
    %1247 = vmatpush1.xpose.msra.mxu0 0.0
    %1248 = vmatprep.subr.mxu0 0.0
    %1249 = vmatpush1.xpose.msra.mxu0 0.0
    %1250 = vmatprep.subr.mxu0 0.0
    %1251 = vmatpush1.xpose.msra.mxu0 0.0
    %1252 = vmatprep.subr.mxu0 0.0
    %1253 = vmatpush1.xpose.msra.mxu0 0.0
    %1254 = vmatprep.subr.mxu0 0.0
    %1255 = vmatpush1.xpose.msra.mxu0 0.0
    %1256 = vmatprep.subr.mxu0 0.0
    %1257 = vmatpush1.xpose.msra.mxu0 0.0
    %1258 = vmatprep.subr.mxu0 0.0
    %1259 = vmatpush1.xpose.msra.mxu0 0.0
    %1260 = vmatprep.subr.mxu0 0.0
    %1261 = vmatpush1.xpose.msra.mxu0 0.0
    %1262 = vmatprep.subr.mxu0 0.0
    %1263 = vmatpush1.xpose.msra.mxu0 0.0
    %1264 = vmatprep.subr.mxu0 0.0
    %1265 = vmatpush1.xpose.msra.mxu0 0.0
    %1266 = vmatprep.subr.mxu0 0.0
    %1267 = vmatpush1.xpose.msra.mxu0 0.0
    %1268 = vmatprep.subr.mxu0 0.0
    %1269 = vmatpush1.xpose.msra.mxu0 0.0
    %1270 = vmatprep.subr.mxu0 0.0
    %1271 = vmatpush1.xpose.msra.mxu0 0.0
    %1272 = vmatprep.subr.mxu0 0.0
    %1273 = vmatpush1.xpose.msra.mxu0 0.0
    %1274 = vmatprep.subr.mxu0 0.0
    %1275 = vmatpush1.xpose.msra.mxu0 0.0
    %1276 = vmatprep.mubr.f32.mxu0 0.0
    %1277 = vmatmul.mubr.f32.gmra.mrb[0].mxu0 %v1208
    %v1278 = vpop.f32.mrb[0].mxu0
    %v1279 = vadd.f32 0.0, %v1278
    %v1280 = vpop.f32.mrb[0].mxu0
    %1281 = vdwg.mxu0
    %v1282 = vmul.f32 %v740, 0.35355338
    %v1283 = vmul.f32 %v817, 0.35355338
    %v1284 = vmul.f32 %v894, 0.35355338
    %v1285 = vmul.f32 %v971, 0.35355338
    %v1286 = vmul.f32 %v1048, 0.35355338
    %v1287 = vmul.f32 %v1125, 0.35355338
    %v1288 = vmul.f32 %v1202, 0.35355338
    %v1289 = vmul.f32 %v1279, 0.35355338
    %v1290 = vlaneseq
    %v1291 = vshrl.u32 %v1290, 7
    %v1292 = vlaneseq
    %v1293 = vand.u32 %v1292, 127
    %vm1294 = vcmp.gt.s32.totalorder %v1293, %v1291
    %v1295 = vsel %vm1294, -1e+30, %v1282
    %v1296 = vsel %vm1294, -1e+30, %v1283
    %v1297 = vsel %vm1294, -1e+30, %v1284
    %v1298 = vsel %vm1294, -1e+30, %v1285
    %v1299 = vsel %vm1294, -1e+30, %v1286
    %v1300 = vsel %vm1294, -1e+30, %v1287
    %v1301 = vsel %vm1294, -1e+30, %v1288
    %v1302 = vsel %vm1294, -1e+30, %v1289
    %v1303 = vsel %vm668, %v1295, -inf
    %1304 = vmax.xlane.f32.xlu0 %v1303
    %v1305 = vpop.xlane.xlu0 %1304
    %v1306 = vsel %vm668, %v1296, -inf
    %1307 = vmax.xlane.f32.xlu0 %v1306
    %v1308 = vpop.xlane.xlu0 %1307
    %v1309 = vsel %vm668, %v1297, -inf
    %1310 = vmax.xlane.f32.xlu0 %v1309
    %v1311 = vpop.xlane.xlu0 %1310
    %v1312 = vsel %vm668, %v1298, -inf
    %1313 = vmax.xlane.f32.xlu0 %v1312
    %v1314 = vpop.xlane.xlu0 %1313
    %v1315 = vsel %vm668, %v1299, -inf
    %1316 = vmax.xlane.f32.xlu0 %v1315
    %v1317 = vpop.xlane.xlu0 %1316
    %v1318 = vsel %vm668, %v1300, -inf
    %1319 = vmax.xlane.f32.xlu0 %v1318
    %v1320 = vpop.xlane.xlu0 %1319
    %v1321 = vsel %vm668, %v1301, -inf
    %1322 = vmax.xlane.f32.xlu0 %v1321
    %v1323 = vpop.xlane.xlu0 %1322
    %v1324 = vsel %vm668, %v1302, -inf
    %1325 = vmax.xlane.f32.xlu0 %v1324
    %v1326 = vpop.xlane.xlu0 %1325
    %v1327 = vsub.f32 %v1295, %v1305
    %v1328 = vsub.f32 %v1296, %v1308
    %v1329 = vsub.f32 %v1297, %v1311
    %v1330 = vsub.f32 %v1298, %v1314
    %v1331 = vsub.f32 %v1299, %v1317
    %v1332 = vsub.f32 %v1300, %v1320
    %v1333 = vsub.f32 %v1301, %v1323
    %v1334 = vsub.f32 %v1302, %v1326
    %v1335 = vmul.f32 %v1327, 1.442695
    %v1336 = vpow.pop %v1335
    %v1337 = vmul.f32 %v1328, 1.442695
    %v1338 = vpow.pop %v1337
    %v1339 = vmul.f32 %v1329, 1.442695
    %v1340 = vpow.pop %v1339
    %v1341 = vmul.f32 %v1330, 1.442695
    %v1342 = vpow.pop %v1341
    %v1343 = vmul.f32 %v1331, 1.442695
    %v1344 = vpow.pop %v1343
    %v1345 = vmul.f32 %v1332, 1.442695
    %v1346 = vpow.pop %v1345
    %v1347 = vmul.f32 %v1333, 1.442695
    %v1348 = vpow.pop %v1347
    %v1349 = vmul.f32 %v1334, 1.442695
    %v1350 = vpow.pop %v1349
    %v1351 = vsel %vm668, %v1336, 0.0
    %1352 = vadd.xlane.f32.xlu0 %v1351
    %v1353 = vpop.xlane.xlu0 %1352
    %v1354 = vsel %vm668, %v1338, 0.0
    %1355 = vadd.xlane.f32.xlu0 %v1354
    %v1356 = vpop.xlane.xlu0 %1355
    %v1357 = vsel %vm668, %v1340, 0.0
    %1358 = vadd.xlane.f32.xlu0 %v1357
    %v1359 = vpop.xlane.xlu0 %1358
    %v1360 = vsel %vm668, %v1342, 0.0
    %1361 = vadd.xlane.f32.xlu0 %v1360
    %v1362 = vpop.xlane.xlu0 %1361
    %v1363 = vsel %vm668, %v1344, 0.0
    %1364 = vadd.xlane.f32.xlu0 %v1363
    %v1365 = vpop.xlane.xlu0 %1364
    %v1366 = vsel %vm668, %v1346, 0.0
    %1367 = vadd.xlane.f32.xlu0 %v1366
    %v1368 = vpop.xlane.xlu0 %1367
    %v1369 = vsel %vm668, %v1348, 0.0
    %1370 = vadd.xlane.f32.xlu0 %v1369
    %v1371 = vpop.xlane.xlu0 %1370
    %v1372 = vsel %vm668, %v1350, 0.0
    %1373 = vadd.xlane.f32.xlu0 %v1372
    %v1374 = vpop.xlane.xlu0 %1373
    %v1375 = vrcp.pop %v1353
    %v1376 = vrcp.pop %v1356
    %v1377 = vrcp.pop %v1359
    %v1378 = vrcp.pop %v1362
    %v1379 = vrcp.pop %v1365
    %v1380 = vrcp.pop %v1368
    %v1381 = vrcp.pop %v1371
    %v1382 = vrcp.pop %v1374
    %v1383 = vmul.f32 %v1336, %v1375
    %v1384 = vmul.f32 %v1338, %v1376
    %v1385 = vmul.f32 %v1340, %v1377
    %v1386 = vmul.f32 %v1342, %v1378
    %v1387 = vmul.f32 %v1344, %v1379
    %v1388 = vmul.f32 %v1346, %v1380
    %v1389 = vmul.f32 %v1348, %v1381
    %v1390 = vmul.f32 %v1350, %v1382
    %1391 = vrot.lane.b32.xlu0 %v169, 112
    %v1392 = vpop.permute.xlu0 %1391
    %v1395 = vsel %vm668, %v1383, 0
    %1397 = vmatprep.subr.mxu0 0.0
    %1398 = vmatpush1.msra.mxu0 %v1392
    %1399 = vmatprep.subr.mxu0 0.0
    %1400 = vmatpush1.msra.mxu0 0.0
    %1401 = vmatprep.subr.mxu0 0.0
    %1402 = vmatpush1.msra.mxu0 0.0
    %1403 = vmatprep.subr.mxu0 0.0
    %1404 = vmatpush1.msra.mxu0 0.0
    %1405 = vmatprep.subr.mxu0 0.0
    %1406 = vmatpush1.msra.mxu0 0.0
    %1407 = vmatprep.subr.mxu0 0.0
    %1408 = vmatpush1.msra.mxu0 0.0
    %1409 = vmatprep.subr.mxu0 0.0
    %1410 = vmatpush1.msra.mxu0 0.0
    %1411 = vmatprep.subr.mxu0 0.0
    %1412 = vmatpush1.msra.mxu0 0.0
    %1413 = vmatprep.subr.mxu0 0.0
    %1414 = vmatpush1.msra.mxu0 0.0
    %1415 = vmatprep.subr.mxu0 0.0
    %1416 = vmatpush1.msra.mxu0 0.0
    %1417 = vmatprep.subr.mxu0 0.0
    %1418 = vmatpush1.msra.mxu0 0.0
    %1419 = vmatprep.subr.mxu0 0.0
    %1420 = vmatpush1.msra.mxu0 0.0
    %1421 = vmatprep.subr.mxu0 0.0
    %1422 = vmatpush1.msra.mxu0 0.0
    %1423 = vmatprep.subr.mxu0 0.0
    %1424 = vmatpush1.msra.mxu0 0.0
    %1425 = vmatprep.subr.mxu0 0.0
    %1426 = vmatpush1.msra.mxu0 0.0
    %1427 = vmatprep.subr.mxu0 0.0
    %1428 = vmatpush1.msra.mxu0 0.0
    %1429 = vmatprep.subr.mxu0 0.0
    %1430 = vmatpush1.msra.mxu0 0.0
    %1431 = vmatprep.subr.mxu0 0.0
    %1432 = vmatpush1.msra.mxu0 0.0
    %1433 = vmatprep.subr.mxu0 0.0
    %1434 = vmatpush1.msra.mxu0 0.0
    %1435 = vmatprep.subr.mxu0 0.0
    %1436 = vmatpush1.msra.mxu0 0.0
    %1437 = vmatprep.subr.mxu0 0.0
    %1438 = vmatpush1.msra.mxu0 0.0
    %1439 = vmatprep.subr.mxu0 0.0
    %1440 = vmatpush1.msra.mxu0 0.0
    %1441 = vmatprep.subr.mxu0 0.0
    %1442 = vmatpush1.msra.mxu0 0.0
    %1443 = vmatprep.subr.mxu0 0.0
    %1444 = vmatpush1.msra.mxu0 0.0
    %1445 = vmatprep.subr.mxu0 0.0
    %1446 = vmatpush1.msra.mxu0 0.0
    %1447 = vmatprep.subr.mxu0 0.0
    %1448 = vmatpush1.msra.mxu0 0.0
    %1449 = vmatprep.subr.mxu0 0.0
    %1450 = vmatpush1.msra.mxu0 0.0
    %1451 = vmatprep.subr.mxu0 0.0
    %1452 = vmatpush1.msra.mxu0 0.0
    %1453 = vmatprep.subr.mxu0 0.0
    %1454 = vmatpush1.msra.mxu0 0.0
    %1455 = vmatprep.subr.mxu0 0.0
    %1456 = vmatpush1.msra.mxu0 0.0
    %1457 = vmatprep.subr.mxu0 0.0
    %1458 = vmatpush1.msra.mxu0 0.0
    %1459 = vmatprep.subr.mxu0 0.0
    %1460 = vmatpush1.msra.mxu0 0.0
    %1461 = vmatprep.mubr.f32.mxu0 0.0
    %1462 = vmatmul.mubr.f32.gmra.mrb[0].mxu0 %v1395
    %v1463 = vpop.f32.mrb[0].mxu0
    %v1464 = vadd.f32 0.0, %v1463
    %v1465 = vpop.f32.mrb[0].mxu0
    %1466 = vdwg.mxu0
    %1467 = vrot.lane.b32.xlu0 %v239, 112
    %v1468 = vpop.permute.xlu0 %1467
    %v1471 = vsel %vm668, %v1384, 0
    %1473 = vmatprep.subr.mxu0 0.0
    %1474 = vmatpush1.msra.mxu0 %v1468
    %1475 = vmatprep.subr.mxu0 0.0
    %1476 = vmatpush1.msra.mxu0 0.0
    %1477 = vmatprep.subr.mxu0 0.0
    %1478 = vmatpush1.msra.mxu0 0.0
    %1479 = vmatprep.subr.mxu0 0.0
    %1480 = vmatpush1.msra.mxu0 0.0
    %1481 = vmatprep.subr.mxu0 0.0
    %1482 = vmatpush1.msra.mxu0 0.0
    %1483 = vmatprep.subr.mxu0 0.0
    %1484 = vmatpush1.msra.mxu0 0.0
    %1485 = vmatprep.subr.mxu0 0.0
    %1486 = vmatpush1.msra.mxu0 0.0
    %1487 = vmatprep.subr.mxu0 0.0
    %1488 = vmatpush1.msra.mxu0 0.0
    %1489 = vmatprep.subr.mxu0 0.0
    %1490 = vmatpush1.msra.mxu0 0.0
    %1491 = vmatprep.subr.mxu0 0.0
    %1492 = vmatpush1.msra.mxu0 0.0
    %1493 = vmatprep.subr.mxu0 0.0
    %1494 = vmatpush1.msra.mxu0 0.0
    %1495 = vmatprep.subr.mxu0 0.0
    %1496 = vmatpush1.msra.mxu0 0.0
    %1497 = vmatprep.subr.mxu0 0.0
    %1498 = vmatpush1.msra.mxu0 0.0
    %1499 = vmatprep.subr.mxu0 0.0
    %1500 = vmatpush1.msra.mxu0 0.0
    %1501 = vmatprep.subr.mxu0 0.0
    %1502 = vmatpush1.msra.mxu0 0.0
    %1503 = vmatprep.subr.mxu0 0.0
    %1504 = vmatpush1.msra.mxu0 0.0
    %1505 = vmatprep.subr.mxu0 0.0
    %1506 = vmatpush1.msra.mxu0 0.0
    %1507 = vmatprep.subr.mxu0 0.0
    %1508 = vmatpush1.msra.mxu0 0.0
    %1509 = vmatprep.subr.mxu0 0.0
    %1510 = vmatpush1.msra.mxu0 0.0
    %1511 = vmatprep.subr.mxu0 0.0
    %1512 = vmatpush1.msra.mxu0 0.0
    %1513 = vmatprep.subr.mxu0 0.0
    %1514 = vmatpush1.msra.mxu0 0.0
    %1515 = vmatprep.subr.mxu0 0.0
    %1516 = vmatpush1.msra.mxu0 0.0
    %1517 = vmatprep.subr.mxu0 0.0
    %1518 = vmatpush1.msra.mxu0 0.0
    %1519 = vmatprep.subr.mxu0 0.0
    %1520 = vmatpush1.msra.mxu0 0.0
    %1521 = vmatprep.subr.mxu0 0.0
    %1522 = vmatpush1.msra.mxu0 0.0
    %1523 = vmatprep.subr.mxu0 0.0
    %1524 = vmatpush1.msra.mxu0 0.0
    %1525 = vmatprep.subr.mxu0 0.0
    %1526 = vmatpush1.msra.mxu0 0.0
    %1527 = vmatprep.subr.mxu0 0.0
    %1528 = vmatpush1.msra.mxu0 0.0
    %1529 = vmatprep.subr.mxu0 0.0
    %1530 = vmatpush1.msra.mxu0 0.0
    %1531 = vmatprep.subr.mxu0 0.0
    %1532 = vmatpush1.msra.mxu0 0.0
    %1533 = vmatprep.subr.mxu0 0.0
    %1534 = vmatpush1.msra.mxu0 0.0
    %1535 = vmatprep.subr.mxu0 0.0
    %1536 = vmatpush1.msra.mxu0 0.0
    %1537 = vmatprep.mubr.f32.mxu0 0.0
    %1538 = vmatmul.mubr.f32.gmra.mrb[0].mxu0 %v1471
    %v1539 = vpop.f32.mrb[0].mxu0
    %v1540 = vadd.f32 0.0, %v1539
    %v1541 = vpop.f32.mrb[0].mxu0
    %1542 = vdwg.mxu0
    %1543 = vrot.lane.b32.xlu0 %v309, 112
    %v1544 = vpop.permute.xlu0 %1543
    %v1547 = vsel %vm668, %v1385, 0
    %1549 = vmatprep.subr.mxu0 0.0
    %1550 = vmatpush1.msra.mxu0 %v1544
    %1551 = vmatprep.subr.mxu0 0.0
    %1552 = vmatpush1.msra.mxu0 0.0
    %1553 = vmatprep.subr.mxu0 0.0
    %1554 = vmatpush1.msra.mxu0 0.0
    %1555 = vmatprep.subr.mxu0 0.0
    %1556 = vmatpush1.msra.mxu0 0.0
    %1557 = vmatprep.subr.mxu0 0.0
    %1558 = vmatpush1.msra.mxu0 0.0
    %1559 = vmatprep.subr.mxu0 0.0
    %1560 = vmatpush1.msra.mxu0 0.0
    %1561 = vmatprep.subr.mxu0 0.0
    %1562 = vmatpush1.msra.mxu0 0.0
    %1563 = vmatprep.subr.mxu0 0.0
    %1564 = vmatpush1.msra.mxu0 0.0
    %1565 = vmatprep.subr.mxu0 0.0
    %1566 = vmatpush1.msra.mxu0 0.0
    %1567 = vmatprep.subr.mxu0 0.0
    %1568 = vmatpush1.msra.mxu0 0.0
    %1569 = vmatprep.subr.mxu0 0.0
    %1570 = vmatpush1.msra.mxu0 0.0
    %1571 = vmatprep.subr.mxu0 0.0
    %1572 = vmatpush1.msra.mxu0 0.0
    %1573 = vmatprep.subr.mxu0 0.0
    %1574 = vmatpush1.msra.mxu0 0.0
    %1575 = vmatprep.subr.mxu0 0.0
    %1576 = vmatpush1.msra.mxu0 0.0
    %1577 = vmatprep.subr.mxu0 0.0
    %1578 = vmatpush1.msra.mxu0 0.0
    %1579 = vmatprep.subr.mxu0 0.0
    %1580 = vmatpush1.msra.mxu0 0.0
    %1581 = vmatprep.subr.mxu0 0.0
    %1582 = vmatpush1.msra.mxu0 0.0
    %1583 = vmatprep.subr.mxu0 0.0
    %1584 = vmatpush1.msra.mxu0 0.0
    %1585 = vmatprep.subr.mxu0 0.0
    %1586 = vmatpush1.msra.mxu0 0.0
    %1587 = vmatprep.subr.mxu0 0.0
    %1588 = vmatpush1.msra.mxu0 0.0
    %1589 = vmatprep.subr.mxu0 0.0
    %1590 = vmatpush1.msra.mxu0 0.0
    %1591 = vmatprep.subr.mxu0 0.0
    %1592 = vmatpush1.msra.mxu0 0.0
    %1593 = vmatprep.subr.mxu0 0.0
    %1594 = vmatpush1.msra.mxu0 0.0
    %1595 = vmatprep.subr.mxu0 0.0
    %1596 = vmatpush1.msra.mxu0 0.0
    %1597 = vmatprep.subr.mxu0 0.0
    %1598 = vmatpush1.msra.mxu0 0.0
    %1599 = vmatprep.subr.mxu0 0.0
    %1600 = vmatpush1.msra.mxu0 0.0
    %1601 = vmatprep.subr.mxu0 0.0
    %1602 = vmatpush1.msra.mxu0 0.0
    %1603 = vmatprep.subr.mxu0 0.0
    %1604 = vmatpush1.msra.mxu0 0.0
    %1605 = vmatprep.subr.mxu0 0.0
    %1606 = vmatpush1.msra.mxu0 0.0
    %1607 = vmatprep.subr.mxu0 0.0
    %1608 = vmatpush1.msra.mxu0 0.0
    %1609 = vmatprep.subr.mxu0 0.0
    %1610 = vmatpush1.msra.mxu0 0.0
    %1611 = vmatprep.subr.mxu0 0.0
    %1612 = vmatpush1.msra.mxu0 0.0
    %1613 = vmatprep.mubr.f32.mxu0 0.0
    %1614 = vmatmul.mubr.f32.gmra.mrb[0].mxu0 %v1547
    %v1615 = vpop.f32.mrb[0].mxu0
    %v1616 = vadd.f32 0.0, %v1615
    %v1617 = vpop.f32.mrb[0].mxu0
    %1618 = vdwg.mxu0
    %1619 = vrot.lane.b32.xlu0 %v379, 112
    %v1620 = vpop.permute.xlu0 %1619
    %v1623 = vsel %vm668, %v1386, 0
    %1625 = vmatprep.subr.mxu0 0.0
    %1626 = vmatpush1.msra.mxu0 %v1620
    %1627 = vmatprep.subr.mxu0 0.0
    %1628 = vmatpush1.msra.mxu0 0.0
    %1629 = vmatprep.subr.mxu0 0.0
    %1630 = vmatpush1.msra.mxu0 0.0
    %1631 = vmatprep.subr.mxu0 0.0
    %1632 = vmatpush1.msra.mxu0 0.0
    %1633 = vmatprep.subr.mxu0 0.0
    %1634 = vmatpush1.msra.mxu0 0.0
    %1635 = vmatprep.subr.mxu0 0.0
    %1636 = vmatpush1.msra.mxu0 0.0
    %1637 = vmatprep.subr.mxu0 0.0
    %1638 = vmatpush1.msra.mxu0 0.0
    %1639 = vmatprep.subr.mxu0 0.0
    %1640 = vmatpush1.msra.mxu0 0.0
    %1641 = vmatprep.subr.mxu0 0.0
    %1642 = vmatpush1.msra.mxu0 0.0
    %1643 = vmatprep.subr.mxu0 0.0
    %1644 = vmatpush1.msra.mxu0 0.0
    %1645 = vmatprep.subr.mxu0 0.0
    %1646 = vmatpush1.msra.mxu0 0.0
    %1647 = vmatprep.subr.mxu0 0.0
    %1648 = vmatpush1.msra.mxu0 0.0
    %1649 = vmatprep.subr.mxu0 0.0
    %1650 = vmatpush1.msra.mxu0 0.0
    %1651 = vmatprep.subr.mxu0 0.0
    %1652 = vmatpush1.msra.mxu0 0.0
    %1653 = vmatprep.subr.mxu0 0.0
    %1654 = vmatpush1.msra.mxu0 0.0
    %1655 = vmatprep.subr.mxu0 0.0
    %1656 = vmatpush1.msra.mxu0 0.0
    %1657 = vmatprep.subr.mxu0 0.0
    %1658 = vmatpush1.msra.mxu0 0.0
    %1659 = vmatprep.subr.mxu0 0.0
    %1660 = vmatpush1.msra.mxu0 0.0
    %1661 = vmatprep.subr.mxu0 0.0
    %1662 = vmatpush1.msra.mxu0 0.0
    %1663 = vmatprep.subr.mxu0 0.0
    %1664 = vmatpush1.msra.mxu0 0.0
    %1665 = vmatprep.subr.mxu0 0.0
    %1666 = vmatpush1.msra.mxu0 0.0
    %1667 = vmatprep.subr.mxu0 0.0
    %1668 = vmatpush1.msra.mxu0 0.0
    %1669 = vmatprep.subr.mxu0 0.0
    %1670 = vmatpush1.msra.mxu0 0.0
    %1671 = vmatprep.subr.mxu0 0.0
    %1672 = vmatpush1.msra.mxu0 0.0
    %1673 = vmatprep.subr.mxu0 0.0
    %1674 = vmatpush1.msra.mxu0 0.0
    %1675 = vmatprep.subr.mxu0 0.0
    %1676 = vmatpush1.msra.mxu0 0.0
    %1677 = vmatprep.subr.mxu0 0.0
    %1678 = vmatpush1.msra.mxu0 0.0
    %1679 = vmatprep.subr.mxu0 0.0
    %1680 = vmatpush1.msra.mxu0 0.0
    %1681 = vmatprep.subr.mxu0 0.0
    %1682 = vmatpush1.msra.mxu0 0.0
    %1683 = vmatprep.subr.mxu0 0.0
    %1684 = vmatpush1.msra.mxu0 0.0
    %1685 = vmatprep.subr.mxu0 0.0
    %1686 = vmatpush1.msra.mxu0 0.0
    %1687 = vmatprep.subr.mxu0 0.0
    %1688 = vmatpush1.msra.mxu0 0.0
    %1689 = vmatprep.mubr.f32.mxu0 0.0
    %1690 = vmatmul.mubr.f32.gmra.mrb[0].mxu0 %v1623
    %v1691 = vpop.f32.mrb[0].mxu0
    %v1692 = vadd.f32 0.0, %v1691
    %v1693 = vpop.f32.mrb[0].mxu0
    %1694 = vdwg.mxu0
    %1695 = vrot.lane.b32.xlu0 %v452, 112
    %v1696 = vpop.permute.xlu0 %1695
    %v1699 = vsel %vm668, %v1387, 0
    %1701 = vmatprep.subr.mxu0 0.0
    %1702 = vmatpush1.msra.mxu0 %v1696
    %1703 = vmatprep.subr.mxu0 0.0
    %1704 = vmatpush1.msra.mxu0 0.0
    %1705 = vmatprep.subr.mxu0 0.0
    %1706 = vmatpush1.msra.mxu0 0.0
    %1707 = vmatprep.subr.mxu0 0.0
    %1708 = vmatpush1.msra.mxu0 0.0
    %1709 = vmatprep.subr.mxu0 0.0
    %1710 = vmatpush1.msra.mxu0 0.0
    %1711 = vmatprep.subr.mxu0 0.0
    %1712 = vmatpush1.msra.mxu0 0.0
    %1713 = vmatprep.subr.mxu0 0.0
    %1714 = vmatpush1.msra.mxu0 0.0
    %1715 = vmatprep.subr.mxu0 0.0
    %1716 = vmatpush1.msra.mxu0 0.0
    %1717 = vmatprep.subr.mxu0 0.0
    %1718 = vmatpush1.msra.mxu0 0.0
    %1719 = vmatprep.subr.mxu0 0.0
    %1720 = vmatpush1.msra.mxu0 0.0
    %1721 = vmatprep.subr.mxu0 0.0
    %1722 = vmatpush1.msra.mxu0 0.0
    %1723 = vmatprep.subr.mxu0 0.0
    %1724 = vmatpush1.msra.mxu0 0.0
    %1725 = vmatprep.subr.mxu0 0.0
    %1726 = vmatpush1.msra.mxu0 0.0
    %1727 = vmatprep.subr.mxu0 0.0
    %1728 = vmatpush1.msra.mxu0 0.0
    %1729 = vmatprep.subr.mxu0 0.0
    %1730 = vmatpush1.msra.mxu0 0.0
    %1731 = vmatprep.subr.mxu0 0.0
    %1732 = vmatpush1.msra.mxu0 0.0
    %1733 = vmatprep.subr.mxu0 0.0
    %1734 = vmatpush1.msra.mxu0 0.0
    %1735 = vmatprep.subr.mxu0 0.0
    %1736 = vmatpush1.msra.mxu0 0.0
    %1737 = vmatprep.subr.mxu0 0.0
    %1738 = vmatpush1.msra.mxu0 0.0
    %1739 = vmatprep.subr.mxu0 0.0
    %1740 = vmatpush1.msra.mxu0 0.0
    %1741 = vmatprep.subr.mxu0 0.0
    %1742 = vmatpush1.msra.mxu0 0.0
    %1743 = vmatprep.subr.mxu0 0.0
    %1744 = vmatpush1.msra.mxu0 0.0
    %1745 = vmatprep.subr.mxu0 0.0
    %1746 = vmatpush1.msra.mxu0 0.0
    %1747 = vmatprep.subr.mxu0 0.0
    %1748 = vmatpush1.msra.mxu0 0.0
    %1749 = vmatprep.subr.mxu0 0.0
    %1750 = vmatpush1.msra.mxu0 0.0
    %1751 = vmatprep.subr.mxu0 0.0
    %1752 = vmatpush1.msra.mxu0 0.0
    %1753 = vmatprep.subr.mxu0 0.0
    %1754 = vmatpush1.msra.mxu0 0.0
    %1755 = vmatprep.subr.mxu0 0.0
    %1756 = vmatpush1.msra.mxu0 0.0
    %1757 = vmatprep.subr.mxu0 0.0
    %1758 = vmatpush1.msra.mxu0 0.0
    %1759 = vmatprep.subr.mxu0 0.0
    %1760 = vmatpush1.msra.mxu0 0.0
    %1761 = vmatprep.subr.mxu0 0.0
    %1762 = vmatpush1.msra.mxu0 0.0
    %1763 = vmatprep.subr.mxu0 0.0
    %1764 = vmatpush1.msra.mxu0 0.0
    %1765 = vmatprep.mubr.f32.mxu0 0.0
    %1766 = vmatmul.mubr.f32.gmra.mrb[0].mxu0 %v1699
    %v1767 = vpop.f32.mrb[0].mxu0
    %v1768 = vadd.f32 0.0, %v1767
    %v1769 = vpop.f32.mrb[0].mxu0
    %1770 = vdwg.mxu0
    %1771 = vrot.lane.b32.xlu0 %v522, 112
    %v1772 = vpop.permute.xlu0 %1771
    %v1775 = vsel %vm668, %v1388, 0
    %1777 = vmatprep.subr.mxu0 0.0
    %1778 = vmatpush1.msra.mxu0 %v1772
    %1779 = vmatprep.subr.mxu0 0.0
    %1780 = vmatpush1.msra.mxu0 0.0
    %1781 = vmatprep.subr.mxu0 0.0
    %1782 = vmatpush1.msra.mxu0 0.0
    %1783 = vmatprep.subr.mxu0 0.0
    %1784 = vmatpush1.msra.mxu0 0.0
    %1785 = vmatprep.subr.mxu0 0.0
    %1786 = vmatpush1.msra.mxu0 0.0
    %1787 = vmatprep.subr.mxu0 0.0
    %1788 = vmatpush1.msra.mxu0 0.0
    %1789 = vmatprep.subr.mxu0 0.0
    %1790 = vmatpush1.msra.mxu0 0.0
    %1791 = vmatprep.subr.mxu0 0.0
    %1792 = vmatpush1.msra.mxu0 0.0
    %1793 = vmatprep.subr.mxu0 0.0
    %1794 = vmatpush1.msra.mxu0 0.0
    %1795 = vmatprep.subr.mxu0 0.0
    %1796 = vmatpush1.msra.mxu0 0.0
    %1797 = vmatprep.subr.mxu0 0.0
    %1798 = vmatpush1.msra.mxu0 0.0
    %1799 = vmatprep.subr.mxu0 0.0
    %1800 = vmatpush1.msra.mxu0 0.0
    %1801 = vmatprep.subr.mxu0 0.0
    %1802 = vmatpush1.msra.mxu0 0.0
    %1803 = vmatprep.subr.mxu0 0.0
    %1804 = vmatpush1.msra.mxu0 0.0
    %1805 = vmatprep.subr.mxu0 0.0
    %1806 = vmatpush1.msra.mxu0 0.0
    %1807 = vmatprep.subr.mxu0 0.0
    %1808 = vmatpush1.msra.mxu0 0.0
    %1809 = vmatprep.subr.mxu0 0.0
    %1810 = vmatpush1.msra.mxu0 0.0
    %1811 = vmatprep.subr.mxu0 0.0
    %1812 = vmatpush1.msra.mxu0 0.0
    %1813 = vmatprep.subr.mxu0 0.0
    %1814 = vmatpush1.msra.mxu0 0.0
    %1815 = vmatprep.subr.mxu0 0.0
    %1816 = vmatpush1.msra.mxu0 0.0
    %1817 = vmatprep.subr.mxu0 0.0
    %1818 = vmatpush1.msra.mxu0 0.0
    %1819 = vmatprep.subr.mxu0 0.0
    %1820 = vmatpush1.msra.mxu0 0.0
    %1821 = vmatprep.subr.mxu0 0.0
    %1822 = vmatpush1.msra.mxu0 0.0
    %1823 = vmatprep.subr.mxu0 0.0
    %1824 = vmatpush1.msra.mxu0 0.0
    %1825 = vmatprep.subr.mxu0 0.0
    %1826 = vmatpush1.msra.mxu0 0.0
    %1827 = vmatprep.subr.mxu0 0.0
    %1828 = vmatpush1.msra.mxu0 0.0
    %1829 = vmatprep.subr.mxu0 0.0
    %1830 = vmatpush1.msra.mxu0 0.0
    %1831 = vmatprep.subr.mxu0 0.0
    %1832 = vmatpush1.msra.mxu0 0.0
    %1833 = vmatprep.subr.mxu0 0.0
    %1834 = vmatpush1.msra.mxu0 0.0
    %1835 = vmatprep.subr.mxu0 0.0
    %1836 = vmatpush1.msra.mxu0 0.0
    %1837 = vmatprep.subr.mxu0 0.0
    %1838 = vmatpush1.msra.mxu0 0.0
    %1839 = vmatprep.subr.mxu0 0.0
    %1840 = vmatpush1.msra.mxu0 0.0
    %1841 = vmatprep.mubr.f32.mxu0 0.0
    %1842 = vmatmul.mubr.f32.gmra.mrb[0].mxu0 %v1775
    %v1843 = vpop.f32.mrb[0].mxu0
    %v1844 = vadd.f32 0.0, %v1843
    %v1845 = vpop.f32.mrb[0].mxu0
    %1846 = vdwg.mxu0
    %1847 = vrot.lane.b32.xlu0 %v592, 112
    %v1848 = vpop.permute.xlu0 %1847
    %v1851 = vsel %vm668, %v1389, 0
    %1853 = vmatprep.subr.mxu0 0.0
    %1854 = vmatpush1.msra.mxu0 %v1848
    %1855 = vmatprep.subr.mxu0 0.0
    %1856 = vmatpush1.msra.mxu0 0.0
    %1857 = vmatprep.subr.mxu0 0.0
    %1858 = vmatpush1.msra.mxu0 0.0
    %1859 = vmatprep.subr.mxu0 0.0
    %1860 = vmatpush1.msra.mxu0 0.0
    %1861 = vmatprep.subr.mxu0 0.0
    %1862 = vmatpush1.msra.mxu0 0.0
    %1863 = vmatprep.subr.mxu0 0.0
    %1864 = vmatpush1.msra.mxu0 0.0
    %1865 = vmatprep.subr.mxu0 0.0
    %1866 = vmatpush1.msra.mxu0 0.0
    %1867 = vmatprep.subr.mxu0 0.0
    %1868 = vmatpush1.msra.mxu0 0.0
    %1869 = vmatprep.subr.mxu0 0.0
    %1870 = vmatpush1.msra.mxu0 0.0
    %1871 = vmatprep.subr.mxu0 0.0
    %1872 = vmatpush1.msra.mxu0 0.0
    %1873 = vmatprep.subr.mxu0 0.0
    %1874 = vmatpush1.msra.mxu0 0.0
    %1875 = vmatprep.subr.mxu0 0.0
    %1876 = vmatpush1.msra.mxu0 0.0
    %1877 = vmatprep.subr.mxu0 0.0
    %1878 = vmatpush1.msra.mxu0 0.0
    %1879 = vmatprep.subr.mxu0 0.0
    %1880 = vmatpush1.msra.mxu0 0.0
    %1881 = vmatprep.subr.mxu0 0.0
    %1882 = vmatpush1.msra.mxu0 0.0
    %1883 = vmatprep.subr.mxu0 0.0
    %1884 = vmatpush1.msra.mxu0 0.0
    %1885 = vmatprep.subr.mxu0 0.0
    %1886 = vmatpush1.msra.mxu0 0.0
    %1887 = vmatprep.subr.mxu0 0.0
    %1888 = vmatpush1.msra.mxu0 0.0
    %1889 = vmatprep.subr.mxu0 0.0
    %1890 = vmatpush1.msra.mxu0 0.0
    %1891 = vmatprep.subr.mxu0 0.0
    %1892 = vmatpush1.msra.mxu0 0.0
    %1893 = vmatprep.subr.mxu0 0.0
    %1894 = vmatpush1.msra.mxu0 0.0
    %1895 = vmatprep.subr.mxu0 0.0
    %1896 = vmatpush1.msra.mxu0 0.0
    %1897 = vmatprep.subr.mxu0 0.0
    %1898 = vmatpush1.msra.mxu0 0.0
    %1899 = vmatprep.subr.mxu0 0.0
    %1900 = vmatpush1.msra.mxu0 0.0
    %1901 = vmatprep.subr.mxu0 0.0
    %1902 = vmatpush1.msra.mxu0 0.0
    %1903 = vmatprep.subr.mxu0 0.0
    %1904 = vmatpush1.msra.mxu0 0.0
    %1905 = vmatprep.subr.mxu0 0.0
    %1906 = vmatpush1.msra.mxu0 0.0
    %1907 = vmatprep.subr.mxu0 0.0
    %1908 = vmatpush1.msra.mxu0 0.0
    %1909 = vmatprep.subr.mxu0 0.0
    %1910 = vmatpush1.msra.mxu0 0.0
    %1911 = vmatprep.subr.mxu0 0.0
    %1912 = vmatpush1.msra.mxu0 0.0
    %1913 = vmatprep.subr.mxu0 0.0
    %1914 = vmatpush1.msra.mxu0 0.0
    %1915 = vmatprep.subr.mxu0 0.0
    %1916 = vmatpush1.msra.mxu0 0.0
    %1917 = vmatprep.mubr.f32.mxu0 0.0
    %1918 = vmatmul.mubr.f32.gmra.mrb[0].mxu0 %v1851
    %v1919 = vpop.f32.mrb[0].mxu0
    %v1920 = vadd.f32 0.0, %v1919
    %v1921 = vpop.f32.mrb[0].mxu0
    %1922 = vdwg.mxu0
    %1923 = vrot.lane.b32.xlu0 %v662, 112
    %v1924 = vpop.permute.xlu0 %1923
    %v1927 = vsel %vm668, %v1390, 0
    %1929 = vmatprep.subr.mxu0 0.0
    %1930 = vmatpush1.msra.mxu0 %v1924
    %1931 = vmatprep.subr.mxu0 0.0
    %1932 = vmatpush1.msra.mxu0 0.0
    %1933 = vmatprep.subr.mxu0 0.0
    %1934 = vmatpush1.msra.mxu0 0.0
    %1935 = vmatprep.subr.mxu0 0.0
    %1936 = vmatpush1.msra.mxu0 0.0
    %1937 = vmatprep.subr.mxu0 0.0
    %1938 = vmatpush1.msra.mxu0 0.0
    %1939 = vmatprep.subr.mxu0 0.0
    %1940 = vmatpush1.msra.mxu0 0.0
    %1941 = vmatprep.subr.mxu0 0.0
    %1942 = vmatpush1.msra.mxu0 0.0
    %1943 = vmatprep.subr.mxu0 0.0
    %1944 = vmatpush1.msra.mxu0 0.0
    %1945 = vmatprep.subr.mxu0 0.0
    %1946 = vmatpush1.msra.mxu0 0.0
    %1947 = vmatprep.subr.mxu0 0.0
    %1948 = vmatpush1.msra.mxu0 0.0
    %1949 = vmatprep.subr.mxu0 0.0
    %1950 = vmatpush1.msra.mxu0 0.0
    %1951 = vmatprep.subr.mxu0 0.0
    %1952 = vmatpush1.msra.mxu0 0.0
    %1953 = vmatprep.subr.mxu0 0.0
    %1954 = vmatpush1.msra.mxu0 0.0
    %1955 = vmatprep.subr.mxu0 0.0
    %1956 = vmatpush1.msra.mxu0 0.0
    %1957 = vmatprep.subr.mxu0 0.0
    %1958 = vmatpush1.msra.mxu0 0.0
    %1959 = vmatprep.subr.mxu0 0.0
    %1960 = vmatpush1.msra.mxu0 0.0
    %1961 = vmatprep.subr.mxu0 0.0
    %1962 = vmatpush1.msra.mxu0 0.0
    %1963 = vmatprep.subr.mxu0 0.0
    %1964 = vmatpush1.msra.mxu0 0.0
    %1965 = vmatprep.subr.mxu0 0.0
    %1966 = vmatpush1.msra.mxu0 0.0
    %1967 = vmatprep.subr.mxu0 0.0
    %1968 = vmatpush1.msra.mxu0 0.0
    %1969 = vmatprep.subr.mxu0 0.0
    %1970 = vmatpush1.msra.mxu0 0.0
    %1971 = vmatprep.subr.mxu0 0.0
    %1972 = vmatpush1.msra.mxu0 0.0
    %1973 = vmatprep.subr.mxu0 0.0
    %1974 = vmatpush1.msra.mxu0 0.0
    %1975 = vmatprep.subr.mxu0 0.0
    %1976 = vmatpush1.msra.mxu0 0.0
    %1977 = vmatprep.subr.mxu0 0.0
    %1978 = vmatpush1.msra.mxu0 0.0
    %1979 = vmatprep.subr.mxu0 0.0
    %1980 = vmatpush1.msra.mxu0 0.0
    %1981 = vmatprep.subr.mxu0 0.0
    %1982 = vmatpush1.msra.mxu0 0.0
    %1983 = vmatprep.subr.mxu0 0.0
    %1984 = vmatpush1.msra.mxu0 0.0
    %1985 = vmatprep.subr.mxu0 0.0
    %1986 = vmatpush1.msra.mxu0 0.0
    %1987 = vmatprep.subr.mxu0 0.0
    %1988 = vmatpush1.msra.mxu0 0.0
    %1989 = vmatprep.subr.mxu0 0.0
    %1990 = vmatpush1.msra.mxu0 0.0
    %1991 = vmatprep.subr.mxu0 0.0
    %1992 = vmatpush1.msra.mxu0 0.0
    %1993 = vmatprep.mubr.f32.mxu0 0.0
    %1994 = vmatmul.mubr.f32.gmra.mrb[0].mxu0 %v1927
    %v1995 = vpop.f32.mrb[0].mxu0
    %v1996 = vadd.f32 0.0, %v1995
    %v1997 = vpop.f32.mrb[0].mxu0
    %1998 = vdwg.mxu0
    %v1999 = vld [vmem:[%s2] sm:$0xff]
    %v2000 = vld [vmem:[%s2 + $0x8] sm:$0xff]
    %v2001 = vld [vmem:[%s2 + $0x10] sm:$0xff]
    %v2002 = vld [vmem:[%s2 + $0x18] sm:$0xff]
    %v2003 = vld [vmem:[%s2 + $0x20] sm:$0xff]
    %v2004 = vld [vmem:[%s2 + $0x28] sm:$0xff]
    %v2005 = vld [vmem:[%s2 + $0x30] sm:$0xff]
    %v2006 = vld [vmem:[%s2 + $0x38] sm:$0xff]
    %v2008 = vsel %vm668, %v1464, 0
    %2010 = vmatprep.subr.mxu0 0.0
    %2011 = vmatpush1.msra.mxu0 %v1999
    %2012 = vmatprep.subr.mxu0 0.0
    %2013 = vmatpush1.msra.mxu0 0.0
    %2014 = vmatprep.subr.mxu0 0.0
    %2015 = vmatpush1.msra.mxu0 0.0
    %2016 = vmatprep.subr.mxu0 0.0
    %2017 = vmatpush1.msra.mxu0 0.0
    %2018 = vmatprep.subr.mxu0 0.0
    %2019 = vmatpush1.msra.mxu0 0.0
    %2020 = vmatprep.subr.mxu0 0.0
    %2021 = vmatpush1.msra.mxu0 0.0
    %2022 = vmatprep.subr.mxu0 0.0
    %2023 = vmatpush1.msra.mxu0 0.0
    %2024 = vmatprep.subr.mxu0 0.0
    %2025 = vmatpush1.msra.mxu0 0.0
    %2026 = vmatprep.subr.mxu0 0.0
    %2027 = vmatpush1.msra.mxu0 0.0
    %2028 = vmatprep.subr.mxu0 0.0
    %2029 = vmatpush1.msra.mxu0 0.0
    %2030 = vmatprep.subr.mxu0 0.0
    %2031 = vmatpush1.msra.mxu0 0.0
    %2032 = vmatprep.subr.mxu0 0.0
    %2033 = vmatpush1.msra.mxu0 0.0
    %2034 = vmatprep.subr.mxu0 0.0
    %2035 = vmatpush1.msra.mxu0 0.0
    %2036 = vmatprep.subr.mxu0 0.0
    %2037 = vmatpush1.msra.mxu0 0.0
    %2038 = vmatprep.subr.mxu0 0.0
    %2039 = vmatpush1.msra.mxu0 0.0
    %2040 = vmatprep.subr.mxu0 0.0
    %2041 = vmatpush1.msra.mxu0 0.0
    %2042 = vmatprep.subr.mxu0 0.0
    %2043 = vmatpush1.msra.mxu0 0.0
    %2044 = vmatprep.subr.mxu0 0.0
    %2045 = vmatpush1.msra.mxu0 0.0
    %2046 = vmatprep.subr.mxu0 0.0
    %2047 = vmatpush1.msra.mxu0 0.0
    %2048 = vmatprep.subr.mxu0 0.0
    %2049 = vmatpush1.msra.mxu0 0.0
    %2050 = vmatprep.subr.mxu0 0.0
    %2051 = vmatpush1.msra.mxu0 0.0
    %2052 = vmatprep.subr.mxu0 0.0
    %2053 = vmatpush1.msra.mxu0 0.0
    %2054 = vmatprep.subr.mxu0 0.0
    %2055 = vmatpush1.msra.mxu0 0.0
    %2056 = vmatprep.subr.mxu0 0.0
    %2057 = vmatpush1.msra.mxu0 0.0
    %2058 = vmatprep.subr.mxu0 0.0
    %2059 = vmatpush1.msra.mxu0 0.0
    %2060 = vmatprep.subr.mxu0 0.0
    %2061 = vmatpush1.msra.mxu0 0.0
    %2062 = vmatprep.subr.mxu0 0.0
    %2063 = vmatpush1.msra.mxu0 0.0
    %2064 = vmatprep.subr.mxu0 0.0
    %2065 = vmatpush1.msra.mxu0 0.0
    %2066 = vmatprep.subr.mxu0 0.0
    %2067 = vmatpush1.msra.mxu0 0.0
    %2068 = vmatprep.subr.mxu0 0.0
    %2069 = vmatpush1.msra.mxu0 0.0
    %2070 = vmatprep.subr.mxu0 0.0
    %2071 = vmatpush1.msra.mxu0 0.0
    %2072 = vmatprep.subr.mxu0 0.0
    %2073 = vmatpush1.msra.mxu0 0.0
    %2074 = vmatprep.mubr.f32.mxu0 0.0
    %2075 = vmatmul.mubr.f32.gmra.mrb[0].mxu0 %v2008
    %v2076 = vpop.f32.mrb[0].mxu0
    %v2077 = vadd.f32 0.0, %v2076
    %v2078 = vpop.f32.mrb[0].mxu0
    %2079 = vdwg.mxu0
    %v2081 = vsel %vm668, %v1540, 0
    %2083 = vmatprep.subr.mxu0 0.0
    %2084 = vmatpush1.msra.mxu0 %v2000
    %2085 = vmatprep.subr.mxu0 0.0
    %2086 = vmatpush1.msra.mxu0 0.0
    %2087 = vmatprep.subr.mxu0 0.0
    %2088 = vmatpush1.msra.mxu0 0.0
    %2089 = vmatprep.subr.mxu0 0.0
    %2090 = vmatpush1.msra.mxu0 0.0
    %2091 = vmatprep.subr.mxu0 0.0
    %2092 = vmatpush1.msra.mxu0 0.0
    %2093 = vmatprep.subr.mxu0 0.0
    %2094 = vmatpush1.msra.mxu0 0.0
    %2095 = vmatprep.subr.mxu0 0.0
    %2096 = vmatpush1.msra.mxu0 0.0
    %2097 = vmatprep.subr.mxu0 0.0
    %2098 = vmatpush1.msra.mxu0 0.0
    %2099 = vmatprep.subr.mxu0 0.0
    %2100 = vmatpush1.msra.mxu0 0.0
    %2101 = vmatprep.subr.mxu0 0.0
    %2102 = vmatpush1.msra.mxu0 0.0
    %2103 = vmatprep.subr.mxu0 0.0
    %2104 = vmatpush1.msra.mxu0 0.0
    %2105 = vmatprep.subr.mxu0 0.0
    %2106 = vmatpush1.msra.mxu0 0.0
    %2107 = vmatprep.subr.mxu0 0.0
    %2108 = vmatpush1.msra.mxu0 0.0
    %2109 = vmatprep.subr.mxu0 0.0
    %2110 = vmatpush1.msra.mxu0 0.0
    %2111 = vmatprep.subr.mxu0 0.0
    %2112 = vmatpush1.msra.mxu0 0.0
    %2113 = vmatprep.subr.mxu0 0.0
    %2114 = vmatpush1.msra.mxu0 0.0
    %2115 = vmatprep.subr.mxu0 0.0
    %2116 = vmatpush1.msra.mxu0 0.0
    %2117 = vmatprep.subr.mxu0 0.0
    %2118 = vmatpush1.msra.mxu0 0.0
    %2119 = vmatprep.subr.mxu0 0.0
    %2120 = vmatpush1.msra.mxu0 0.0
    %2121 = vmatprep.subr.mxu0 0.0
    %2122 = vmatpush1.msra.mxu0 0.0
    %2123 = vmatprep.subr.mxu0 0.0
    %2124 = vmatpush1.msra.mxu0 0.0
    %2125 = vmatprep.subr.mxu0 0.0
    %2126 = vmatpush1.msra.mxu0 0.0
    %2127 = vmatprep.subr.mxu0 0.0
    %2128 = vmatpush1.msra.mxu0 0.0
    %2129 = vmatprep.subr.mxu0 0.0
    %2130 = vmatpush1.msra.mxu0 0.0
    %2131 = vmatprep.subr.mxu0 0.0
    %2132 = vmatpush1.msra.mxu0 0.0
    %2133 = vmatprep.subr.mxu0 0.0
    %2134 = vmatpush1.msra.mxu0 0.0
    %2135 = vmatprep.subr.mxu0 0.0
    %2136 = vmatpush1.msra.mxu0 0.0
    %2137 = vmatprep.subr.mxu0 0.0
    %2138 = vmatpush1.msra.mxu0 0.0
    %2139 = vmatprep.subr.mxu0 0.0
    %2140 = vmatpush1.msra.mxu0 0.0
    %2141 = vmatprep.subr.mxu0 0.0
    %2142 = vmatpush1.msra.mxu0 0.0
    %2143 = vmatprep.subr.mxu0 0.0
    %2144 = vmatpush1.msra.mxu0 0.0
    %2145 = vmatprep.subr.mxu0 0.0
    %2146 = vmatpush1.msra.mxu0 0.0
    %2147 = vmatprep.mubr.f32.mxu0 0.0
    %2148 = vmatmul.mubr.f32.gmra.mrb[0].mxu0 %v2081
    %v2149 = vpop.f32.mrb[0].mxu0
    %v2150 = vadd.f32 0.0, %v2149
    %v2151 = vpop.f32.mrb[0].mxu0
    %2152 = vdwg.mxu0
    %v2154 = vsel %vm668, %v1616, 0
    %2156 = vmatprep.subr.mxu0 0.0
    %2157 = vmatpush1.msra.mxu0 %v2001
    %2158 = vmatprep.subr.mxu0 0.0
    %2159 = vmatpush1.msra.mxu0 0.0
    %2160 = vmatprep.subr.mxu0 0.0
    %2161 = vmatpush1.msra.mxu0 0.0
    %2162 = vmatprep.subr.mxu0 0.0
    %2163 = vmatpush1.msra.mxu0 0.0
    %2164 = vmatprep.subr.mxu0 0.0
    %2165 = vmatpush1.msra.mxu0 0.0
    %2166 = vmatprep.subr.mxu0 0.0
    %2167 = vmatpush1.msra.mxu0 0.0
    %2168 = vmatprep.subr.mxu0 0.0
    %2169 = vmatpush1.msra.mxu0 0.0
    %2170 = vmatprep.subr.mxu0 0.0
    %2171 = vmatpush1.msra.mxu0 0.0
    %2172 = vmatprep.subr.mxu0 0.0
    %2173 = vmatpush1.msra.mxu0 0.0
    %2174 = vmatprep.subr.mxu0 0.0
    %2175 = vmatpush1.msra.mxu0 0.0
    %2176 = vmatprep.subr.mxu0 0.0
    %2177 = vmatpush1.msra.mxu0 0.0
    %2178 = vmatprep.subr.mxu0 0.0
    %2179 = vmatpush1.msra.mxu0 0.0
    %2180 = vmatprep.subr.mxu0 0.0
    %2181 = vmatpush1.msra.mxu0 0.0
    %2182 = vmatprep.subr.mxu0 0.0
    %2183 = vmatpush1.msra.mxu0 0.0
    %2184 = vmatprep.subr.mxu0 0.0
    %2185 = vmatpush1.msra.mxu0 0.0
    %2186 = vmatprep.subr.mxu0 0.0
    %2187 = vmatpush1.msra.mxu0 0.0
    %2188 = vmatprep.subr.mxu0 0.0
    %2189 = vmatpush1.msra.mxu0 0.0
    %2190 = vmatprep.subr.mxu0 0.0
    %2191 = vmatpush1.msra.mxu0 0.0
    %2192 = vmatprep.subr.mxu0 0.0
    %2193 = vmatpush1.msra.mxu0 0.0
    %2194 = vmatprep.subr.mxu0 0.0
    %2195 = vmatpush1.msra.mxu0 0.0
    %2196 = vmatprep.subr.mxu0 0.0
    %2197 = vmatpush1.msra.mxu0 0.0
    %2198 = vmatprep.subr.mxu0 0.0
    %2199 = vmatpush1.msra.mxu0 0.0
    %2200 = vmatprep.subr.mxu0 0.0
    %2201 = vmatpush1.msra.mxu0 0.0
    %2202 = vmatprep.subr.mxu0 0.0
    %2203 = vmatpush1.msra.mxu0 0.0
    %2204 = vmatprep.subr.mxu0 0.0
    %2205 = vmatpush1.msra.mxu0 0.0
    %2206 = vmatprep.subr.mxu0 0.0
    %2207 = vmatpush1.msra.mxu0 0.0
    %2208 = vmatprep.subr.mxu0 0.0
    %2209 = vmatpush1.msra.mxu0 0.0
    %2210 = vmatprep.subr.mxu0 0.0
    %2211 = vmatpush1.msra.mxu0 0.0
    %2212 = vmatprep.subr.mxu0 0.0
    %2213 = vmatpush1.msra.mxu0 0.0
    %2214 = vmatprep.subr.mxu0 0.0
    %2215 = vmatpush1.msra.mxu0 0.0
    %2216 = vmatprep.subr.mxu0 0.0
    %2217 = vmatpush1.msra.mxu0 0.0
    %2218 = vmatprep.subr.mxu0 0.0
    %2219 = vmatpush1.msra.mxu0 0.0
    %2220 = vmatprep.mubr.f32.mxu0 0.0
    %2221 = vmatmul.mubr.f32.gmra.mrb[0].mxu0 %v2154
    %v2222 = vpop.f32.mrb[0].mxu0
    %v2223 = vadd.f32 0.0, %v2222
    %v2224 = vpop.f32.mrb[0].mxu0
    %2225 = vdwg.mxu0
    %v2227 = vsel %vm668, %v1692, 0
    %2229 = vmatprep.subr.mxu0 0.0
    %2230 = vmatpush1.msra.mxu0 %v2002
    %2231 = vmatprep.subr.mxu0 0.0
    %2232 = vmatpush1.msra.mxu0 0.0
    %2233 = vmatprep.subr.mxu0 0.0
    %2234 = vmatpush1.msra.mxu0 0.0
    %2235 = vmatprep.subr.mxu0 0.0
    %2236 = vmatpush1.msra.mxu0 0.0
    %2237 = vmatprep.subr.mxu0 0.0
    %2238 = vmatpush1.msra.mxu0 0.0
    %2239 = vmatprep.subr.mxu0 0.0
    %2240 = vmatpush1.msra.mxu0 0.0
    %2241 = vmatprep.subr.mxu0 0.0
    %2242 = vmatpush1.msra.mxu0 0.0
    %2243 = vmatprep.subr.mxu0 0.0
    %2244 = vmatpush1.msra.mxu0 0.0
    %2245 = vmatprep.subr.mxu0 0.0
    %2246 = vmatpush1.msra.mxu0 0.0
    %2247 = vmatprep.subr.mxu0 0.0
    %2248 = vmatpush1.msra.mxu0 0.0
    %2249 = vmatprep.subr.mxu0 0.0
    %2250 = vmatpush1.msra.mxu0 0.0
    %2251 = vmatprep.subr.mxu0 0.0
    %2252 = vmatpush1.msra.mxu0 0.0
    %2253 = vmatprep.subr.mxu0 0.0
    %2254 = vmatpush1.msra.mxu0 0.0
    %2255 = vmatprep.subr.mxu0 0.0
    %2256 = vmatpush1.msra.mxu0 0.0
    %2257 = vmatprep.subr.mxu0 0.0
    %2258 = vmatpush1.msra.mxu0 0.0
    %2259 = vmatprep.subr.mxu0 0.0
    %2260 = vmatpush1.msra.mxu0 0.0
    %2261 = vmatprep.subr.mxu0 0.0
    %2262 = vmatpush1.msra.mxu0 0.0
    %2263 = vmatprep.subr.mxu0 0.0
    %2264 = vmatpush1.msra.mxu0 0.0
    %2265 = vmatprep.subr.mxu0 0.0
    %2266 = vmatpush1.msra.mxu0 0.0
    %2267 = vmatprep.subr.mxu0 0.0
    %2268 = vmatpush1.msra.mxu0 0.0
    %2269 = vmatprep.subr.mxu0 0.0
    %2270 = vmatpush1.msra.mxu0 0.0
    %2271 = vmatprep.subr.mxu0 0.0
    %2272 = vmatpush1.msra.mxu0 0.0
    %2273 = vmatprep.subr.mxu0 0.0
    %2274 = vmatpush1.msra.mxu0 0.0
    %2275 = vmatprep.subr.mxu0 0.0
    %2276 = vmatpush1.msra.mxu0 0.0
    %2277 = vmatprep.subr.mxu0 0.0
    %2278 = vmatpush1.msra.mxu0 0.0
    %2279 = vmatprep.subr.mxu0 0.0
    %2280 = vmatpush1.msra.mxu0 0.0
    %2281 = vmatprep.subr.mxu0 0.0
    %2282 = vmatpush1.msra.mxu0 0.0
    %2283 = vmatprep.subr.mxu0 0.0
    %2284 = vmatpush1.msra.mxu0 0.0
    %2285 = vmatprep.subr.mxu0 0.0
    %2286 = vmatpush1.msra.mxu0 0.0
    %2287 = vmatprep.subr.mxu0 0.0
    %2288 = vmatpush1.msra.mxu0 0.0
    %2289 = vmatprep.subr.mxu0 0.0
    %2290 = vmatpush1.msra.mxu0 0.0
    %2291 = vmatprep.subr.mxu0 0.0
    %2292 = vmatpush1.msra.mxu0 0.0
    %2293 = vmatprep.mubr.f32.mxu0 0.0
    %2294 = vmatmul.mubr.f32.gmra.mrb[0].mxu0 %v2227
    %v2295 = vpop.f32.mrb[0].mxu0
    %v2296 = vadd.f32 0.0, %v2295
    %v2297 = vpop.f32.mrb[0].mxu0
    %2298 = vdwg.mxu0
    %v2300 = vsel %vm668, %v1768, 0
    %2302 = vmatprep.subr.mxu0 0.0
    %2303 = vmatpush1.msra.mxu0 %v2003
    %2304 = vmatprep.subr.mxu0 0.0
    %2305 = vmatpush1.msra.mxu0 0.0
    %2306 = vmatprep.subr.mxu0 0.0
    %2307 = vmatpush1.msra.mxu0 0.0
    %2308 = vmatprep.subr.mxu0 0.0
    %2309 = vmatpush1.msra.mxu0 0.0
    %2310 = vmatprep.subr.mxu0 0.0
    %2311 = vmatpush1.msra.mxu0 0.0
    %2312 = vmatprep.subr.mxu0 0.0
    %2313 = vmatpush1.msra.mxu0 0.0
    %2314 = vmatprep.subr.mxu0 0.0
    %2315 = vmatpush1.msra.mxu0 0.0
    %2316 = vmatprep.subr.mxu0 0.0
    %2317 = vmatpush1.msra.mxu0 0.0
    %2318 = vmatprep.subr.mxu0 0.0
    %2319 = vmatpush1.msra.mxu0 0.0
    %2320 = vmatprep.subr.mxu0 0.0
    %2321 = vmatpush1.msra.mxu0 0.0
    %2322 = vmatprep.subr.mxu0 0.0
    %2323 = vmatpush1.msra.mxu0 0.0
    %2324 = vmatprep.subr.mxu0 0.0
    %2325 = vmatpush1.msra.mxu0 0.0
    %2326 = vmatprep.subr.mxu0 0.0
    %2327 = vmatpush1.msra.mxu0 0.0
    %2328 = vmatprep.subr.mxu0 0.0
    %2329 = vmatpush1.msra.mxu0 0.0
    %2330 = vmatprep.subr.mxu0 0.0
    %2331 = vmatpush1.msra.mxu0 0.0
    %2332 = vmatprep.subr.mxu0 0.0
    %2333 = vmatpush1.msra.mxu0 0.0
    %2334 = vmatprep.subr.mxu0 0.0
    %2335 = vmatpush1.msra.mxu0 0.0
    %2336 = vmatprep.subr.mxu0 0.0
    %2337 = vmatpush1.msra.mxu0 0.0
    %2338 = vmatprep.subr.mxu0 0.0
    %2339 = vmatpush1.msra.mxu0 0.0
    %2340 = vmatprep.subr.mxu0 0.0
    %2341 = vmatpush1.msra.mxu0 0.0
    %2342 = vmatprep.subr.mxu0 0.0
    %2343 = vmatpush1.msra.mxu0 0.0
    %2344 = vmatprep.subr.mxu0 0.0
    %2345 = vmatpush1.msra.mxu0 0.0
    %2346 = vmatprep.subr.mxu0 0.0
    %2347 = vmatpush1.msra.mxu0 0.0
    %2348 = vmatprep.subr.mxu0 0.0
    %2349 = vmatpush1.msra.mxu0 0.0
    %2350 = vmatprep.subr.mxu0 0.0
    %2351 = vmatpush1.msra.mxu0 0.0
    %2352 = vmatprep.subr.mxu0 0.0
    %2353 = vmatpush1.msra.mxu0 0.0
    %2354 = vmatprep.subr.mxu0 0.0
    %2355 = vmatpush1.msra.mxu0 0.0
    %2356 = vmatprep.subr.mxu0 0.0
    %2357 = vmatpush1.msra.mxu0 0.0
    %2358 = vmatprep.subr.mxu0 0.0
    %2359 = vmatpush1.msra.mxu0 0.0
    %2360 = vmatprep.subr.mxu0 0.0
    %2361 = vmatpush1.msra.mxu0 0.0
    %2362 = vmatprep.subr.mxu0 0.0
    %2363 = vmatpush1.msra.mxu0 0.0
    %2364 = vmatprep.subr.mxu0 0.0
    %2365 = vmatpush1.msra.mxu0 0.0
    %2366 = vmatprep.mubr.f32.mxu0 0.0
    %2367 = vmatmul.mubr.f32.gmra.mrb[0].mxu0 %v2300
    %v2368 = vpop.f32.mrb[0].mxu0
    %v2369 = vadd.f32 0.0, %v2368
    %v2370 = vpop.f32.mrb[0].mxu0
    %2371 = vdwg.mxu0
    %v2373 = vsel %vm668, %v1844, 0
    %2375 = vmatprep.subr.mxu0 0.0
    %2376 = vmatpush1.msra.mxu0 %v2004
    %2377 = vmatprep.subr.mxu0 0.0
    %2378 = vmatpush1.msra.mxu0 0.0
    %2379 = vmatprep.subr.mxu0 0.0
    %2380 = vmatpush1.msra.mxu0 0.0
    %2381 = vmatprep.subr.mxu0 0.0
    %2382 = vmatpush1.msra.mxu0 0.0
    %2383 = vmatprep.subr.mxu0 0.0
    %2384 = vmatpush1.msra.mxu0 0.0
    %2385 = vmatprep.subr.mxu0 0.0
    %2386 = vmatpush1.msra.mxu0 0.0
    %2387 = vmatprep.subr.mxu0 0.0
    %2388 = vmatpush1.msra.mxu0 0.0
    %2389 = vmatprep.subr.mxu0 0.0
    %2390 = vmatpush1.msra.mxu0 0.0
    %2391 = vmatprep.subr.mxu0 0.0
    %2392 = vmatpush1.msra.mxu0 0.0
    %2393 = vmatprep.subr.mxu0 0.0
    %2394 = vmatpush1.msra.mxu0 0.0
    %2395 = vmatprep.subr.mxu0 0.0
    %2396 = vmatpush1.msra.mxu0 0.0
    %2397 = vmatprep.subr.mxu0 0.0
    %2398 = vmatpush1.msra.mxu0 0.0
    %2399 = vmatprep.subr.mxu0 0.0
    %2400 = vmatpush1.msra.mxu0 0.0
    %2401 = vmatprep.subr.mxu0 0.0
    %2402 = vmatpush1.msra.mxu0 0.0
    %2403 = vmatprep.subr.mxu0 0.0
    %2404 = vmatpush1.msra.mxu0 0.0
    %2405 = vmatprep.subr.mxu0 0.0
    %2406 = vmatpush1.msra.mxu0 0.0
    %2407 = vmatprep.subr.mxu0 0.0
    %2408 = vmatpush1.msra.mxu0 0.0
    %2409 = vmatprep.subr.mxu0 0.0
    %2410 = vmatpush1.msra.mxu0 0.0
    %2411 = vmatprep.subr.mxu0 0.0
    %2412 = vmatpush1.msra.mxu0 0.0
    %2413 = vmatprep.subr.mxu0 0.0
    %2414 = vmatpush1.msra.mxu0 0.0
    %2415 = vmatprep.subr.mxu0 0.0
    %2416 = vmatpush1.msra.mxu0 0.0
    %2417 = vmatprep.subr.mxu0 0.0
    %2418 = vmatpush1.msra.mxu0 0.0
    %2419 = vmatprep.subr.mxu0 0.0
    %2420 = vmatpush1.msra.mxu0 0.0
    %2421 = vmatprep.subr.mxu0 0.0
    %2422 = vmatpush1.msra.mxu0 0.0
    %2423 = vmatprep.subr.mxu0 0.0
    %2424 = vmatpush1.msra.mxu0 0.0
    %2425 = vmatprep.subr.mxu0 0.0
    %2426 = vmatpush1.msra.mxu0 0.0
    %2427 = vmatprep.subr.mxu0 0.0
    %2428 = vmatpush1.msra.mxu0 0.0
    %2429 = vmatprep.subr.mxu0 0.0
    %2430 = vmatpush1.msra.mxu0 0.0
    %2431 = vmatprep.subr.mxu0 0.0
    %2432 = vmatpush1.msra.mxu0 0.0
    %2433 = vmatprep.subr.mxu0 0.0
    %2434 = vmatpush1.msra.mxu0 0.0
    %2435 = vmatprep.subr.mxu0 0.0
    %2436 = vmatpush1.msra.mxu0 0.0
    %2437 = vmatprep.subr.mxu0 0.0
    %2438 = vmatpush1.msra.mxu0 0.0
    %2439 = vmatprep.mubr.f32.mxu0 0.0
    %2440 = vmatmul.mubr.f32.gmra.mrb[0].mxu0 %v2373
    %v2441 = vpop.f32.mrb[0].mxu0
    %v2442 = vadd.f32 0.0, %v2441
    %v2443 = vpop.f32.mrb[0].mxu0
    %2444 = vdwg.mxu0
    %v2446 = vsel %vm668, %v1920, 0
    %2448 = vmatprep.subr.mxu0 0.0
    %2449 = vmatpush1.msra.mxu0 %v2005
    %2450 = vmatprep.subr.mxu0 0.0
    %2451 = vmatpush1.msra.mxu0 0.0
    %2452 = vmatprep.subr.mxu0 0.0
    %2453 = vmatpush1.msra.mxu0 0.0
    %2454 = vmatprep.subr.mxu0 0.0
    %2455 = vmatpush1.msra.mxu0 0.0
    %2456 = vmatprep.subr.mxu0 0.0
    %2457 = vmatpush1.msra.mxu0 0.0
    %2458 = vmatprep.subr.mxu0 0.0
    %2459 = vmatpush1.msra.mxu0 0.0
    %2460 = vmatprep.subr.mxu0 0.0
    %2461 = vmatpush1.msra.mxu0 0.0
    %2462 = vmatprep.subr.mxu0 0.0
    %2463 = vmatpush1.msra.mxu0 0.0
    %2464 = vmatprep.subr.mxu0 0.0
    %2465 = vmatpush1.msra.mxu0 0.0
    %2466 = vmatprep.subr.mxu0 0.0
    %2467 = vmatpush1.msra.mxu0 0.0
    %2468 = vmatprep.subr.mxu0 0.0
    %2469 = vmatpush1.msra.mxu0 0.0
    %2470 = vmatprep.subr.mxu0 0.0
    %2471 = vmatpush1.msra.mxu0 0.0
    %2472 = vmatprep.subr.mxu0 0.0
    %2473 = vmatpush1.msra.mxu0 0.0
    %2474 = vmatprep.subr.mxu0 0.0
    %2475 = vmatpush1.msra.mxu0 0.0
    %2476 = vmatprep.subr.mxu0 0.0
    %2477 = vmatpush1.msra.mxu0 0.0
    %2478 = vmatprep.subr.mxu0 0.0
    %2479 = vmatpush1.msra.mxu0 0.0
    %2480 = vmatprep.subr.mxu0 0.0
    %2481 = vmatpush1.msra.mxu0 0.0
    %2482 = vmatprep.subr.mxu0 0.0
    %2483 = vmatpush1.msra.mxu0 0.0
    %2484 = vmatprep.subr.mxu0 0.0
    %2485 = vmatpush1.msra.mxu0 0.0
    %2486 = vmatprep.subr.mxu0 0.0
    %2487 = vmatpush1.msra.mxu0 0.0
    %2488 = vmatprep.subr.mxu0 0.0
    %2489 = vmatpush1.msra.mxu0 0.0
    %2490 = vmatprep.subr.mxu0 0.0
    %2491 = vmatpush1.msra.mxu0 0.0
    %2492 = vmatprep.subr.mxu0 0.0
    %2493 = vmatpush1.msra.mxu0 0.0
    %2494 = vmatprep.subr.mxu0 0.0
    %2495 = vmatpush1.msra.mxu0 0.0
    %2496 = vmatprep.subr.mxu0 0.0
    %2497 = vmatpush1.msra.mxu0 0.0
    %2498 = vmatprep.subr.mxu0 0.0
    %2499 = vmatpush1.msra.mxu0 0.0
    %2500 = vmatprep.subr.mxu0 0.0
    %2501 = vmatpush1.msra.mxu0 0.0
    %2502 = vmatprep.subr.mxu0 0.0
    %2503 = vmatpush1.msra.mxu0 0.0
    %2504 = vmatprep.subr.mxu0 0.0
    %2505 = vmatpush1.msra.mxu0 0.0
    %2506 = vmatprep.subr.mxu0 0.0
    %2507 = vmatpush1.msra.mxu0 0.0
    %2508 = vmatprep.subr.mxu0 0.0
    %2509 = vmatpush1.msra.mxu0 0.0
    %2510 = vmatprep.subr.mxu0 0.0
    %2511 = vmatpush1.msra.mxu0 0.0
    %2512 = vmatprep.mubr.f32.mxu0 0.0
    %2513 = vmatmul.mubr.f32.gmra.mrb[0].mxu0 %v2446
    %v2514 = vpop.f32.mrb[0].mxu0
    %v2515 = vadd.f32 0.0, %v2514
    %v2516 = vpop.f32.mrb[0].mxu0
    %2517 = vdwg.mxu0
    %v2519 = vsel %vm668, %v1996, 0
    %2521 = vmatprep.subr.mxu0 0.0
    %2522 = vmatpush1.msra.mxu0 %v2006
    %2523 = vmatprep.subr.mxu0 0.0
    %2524 = vmatpush1.msra.mxu0 0.0
    %2525 = vmatprep.subr.mxu0 0.0
    %2526 = vmatpush1.msra.mxu0 0.0
    %2527 = vmatprep.subr.mxu0 0.0
    %2528 = vmatpush1.msra.mxu0 0.0
    %2529 = vmatprep.subr.mxu0 0.0
    %2530 = vmatpush1.msra.mxu0 0.0
    %2531 = vmatprep.subr.mxu0 0.0
    %2532 = vmatpush1.msra.mxu0 0.0
    %2533 = vmatprep.subr.mxu0 0.0
    %2534 = vmatpush1.msra.mxu0 0.0
    %2535 = vmatprep.subr.mxu0 0.0
    %2536 = vmatpush1.msra.mxu0 0.0
    %2537 = vmatprep.subr.mxu0 0.0
    %2538 = vmatpush1.msra.mxu0 0.0
    %2539 = vmatprep.subr.mxu0 0.0
    %2540 = vmatpush1.msra.mxu0 0.0
    %2541 = vmatprep.subr.mxu0 0.0
    %2542 = vmatpush1.msra.mxu0 0.0
    %2543 = vmatprep.subr.mxu0 0.0
    %2544 = vmatpush1.msra.mxu0 0.0
    %2545 = vmatprep.subr.mxu0 0.0
    %2546 = vmatpush1.msra.mxu0 0.0
    %2547 = vmatprep.subr.mxu0 0.0
    %2548 = vmatpush1.msra.mxu0 0.0
    %2549 = vmatprep.subr.mxu0 0.0
    %2550 = vmatpush1.msra.mxu0 0.0
    %2551 = vmatprep.subr.mxu0 0.0
    %2552 = vmatpush1.msra.mxu0 0.0
    %2553 = vmatprep.subr.mxu0 0.0
    %2554 = vmatpush1.msra.mxu0 0.0
    %2555 = vmatprep.subr.mxu0 0.0
    %2556 = vmatpush1.msra.mxu0 0.0
    %2557 = vmatprep.subr.mxu0 0.0
    %2558 = vmatpush1.msra.mxu0 0.0
    %2559 = vmatprep.subr.mxu0 0.0
    %2560 = vmatpush1.msra.mxu0 0.0
    %2561 = vmatprep.subr.mxu0 0.0
    %2562 = vmatpush1.msra.mxu0 0.0
    %2563 = vmatprep.subr.mxu0 0.0
    %2564 = vmatpush1.msra.mxu0 0.0
    %2565 = vmatprep.subr.mxu0 0.0
    %2566 = vmatpush1.msra.mxu0 0.0
    %2567 = vmatprep.subr.mxu0 0.0
    %2568 = vmatpush1.msra.mxu0 0.0
    %2569 = vmatprep.subr.mxu0 0.0
    %2570 = vmatpush1.msra.mxu0 0.0
    %2571 = vmatprep.subr.mxu0 0.0
    %2572 = vmatpush1.msra.mxu0 0.0
    %2573 = vmatprep.subr.mxu0 0.0
    %2574 = vmatpush1.msra.mxu0 0.0
    %2575 = vmatprep.subr.mxu0 0.0
    %2576 = vmatpush1.msra.mxu0 0.0
    %2577 = vmatprep.subr.mxu0 0.0
    %2578 = vmatpush1.msra.mxu0 0.0
    %2579 = vmatprep.subr.mxu0 0.0
    %2580 = vmatpush1.msra.mxu0 0.0
    %2581 = vmatprep.subr.mxu0 0.0
    %2582 = vmatpush1.msra.mxu0 0.0
    %2583 = vmatprep.subr.mxu0 0.0
    %2584 = vmatpush1.msra.mxu0 0.0
    %2585 = vmatprep.mubr.f32.mxu0 0.0
    %2586 = vmatmul.mubr.f32.gmra.mrb[0].mxu0 %v2519
    %v2587 = vpop.f32.mrb[0].mxu0
    %v2588 = vadd.f32 0.0, %v2587
    %v2589 = vpop.f32.mrb[0].mxu0
    %2590 = vdwg.mxu0
    %v2591 = vadd.f32 %v2077, %v2150
    %v2592 = vadd.f32 %v2369, %v2442
    %v2593 = vadd.f32 %v2591, %v2223
    %v2594 = vadd.f32 %v2592, %v2515
    %v2595 = vadd.f32 %v2593, %v2296
    %v2596 = vadd.f32 %v2594, %v2588
    %v2597 = vlaneseq
    %v2598 = vshrl.u32 %v2597, 7
    %v2599 = vsub.s32 4, %v2598
    %v2600 = vrot.slane %v26, %v2599
    %v2601 = vadd.f32 %v2595, %v2600
    %v2602 = vadd.f32 %v2596, %v2600
    %v2603 = vadd.f32 %v24, %v2601
    %v2604 = vadd.f32 %v25, %v2602
    %v2605 = vsel %vm27, %v2603, 0.0
    %2606 = vadd.xlane.f32.xlu0 %v2605
    %v2607 = vpop.xlane.xlu0 %2606
    %v2608 = vsel %vm27, %v2604, 0.0
    %2609 = vadd.xlane.f32.xlu0 %v2608
    %v2610 = vpop.xlane.xlu0 %2609
    %v2611 = vmul.f32 %v2607, %v34
    %v2612 = vmul.f32 %v2610, %v34
    %v2613 = vsub.f32 %v2603, %v2611
    %v2614 = vsub.f32 %v2604, %v2612
    %v2615 = vmul.f32 %v2613, %v2613
    %v2616 = vmul.f32 %v2614, %v2614
    %v2617 = vsel %vm27, %v2615, 0.0
    %2618 = vadd.xlane.f32.xlu0 %v2617
    %v2619 = vpop.xlane.xlu0 %2618
    %v2620 = vsel %vm27, %v2616, 0.0
    %2621 = vadd.xlane.f32.xlu0 %v2620
    %v2622 = vpop.xlane.xlu0 %2621
    %v2623 = vmul.f32 %v2619, %v34
    %v2624 = vmul.f32 %v2622, %v34
    %v2625 = vadd.f32 %v2623, 1e-05
    %v2626 = vadd.f32 %v2624, 1e-05
    %v2627 = vrsqrt.pop %v2625
    %v2628 = vrsqrt.pop %v2626
    %v2629 = vmul.f32 %v2613, %v2627
    %v2630 = vmul.f32 %v2614, %v2628
    %v2631 = vlaneseq
    %v2632 = vshrl.u32 %v2631, 7
    %v2633 = vsub.s32 2, %v2632
    %v2634 = vrot.slane %v26, %v2633
    %v2635 = vmul.f32 %v2629, %v2634
    %v2636 = vmul.f32 %v2630, %v2634
    %v2637 = vlaneseq
    %v2638 = vshrl.u32 %v2637, 7
    %v2639 = vsub.s32 3, %v2638
    %v2640 = vrot.slane %v26, %v2639
    %v2641 = vadd.f32 %v2635, %v2640
    %v2642 = vadd.f32 %v2636, %v2640
    %v2643 = vld [vmem:[%s3] sm:$0xff]
    %v2644 = vld [vmem:[%s3 + $0x8] sm:$0xff]
    %v2645 = vld [vmem:[%s3 + $0x10] sm:$0xff]
    %v2646 = vld [vmem:[%s3 + $0x18] sm:$0xff]
    %v2647 = vlaneseq
    %v2648 = vshrl.u32 %v2647, 7
    %v2649 = vsub.s32 6, %v2648
    %v2650 = vrot.slane %v26, %v2649
    %v2652 = vsel %vm27, %v2641, 0
    %v2655 = vsel %vm27, %v2642, 0
    %2657 = vmatprep.subr.mxu0 0.0
    %2658 = vmatpush1.msra.mxu0 %v2643
    %2659 = vmatprep.subr.mxu0 0.0
    %2660 = vmatpush1.msra.mxu0 %v2644
    %2661 = vmatprep.subr.mxu0 0.0
    %2662 = vmatpush1.msra.mxu0 %v2645
    %2663 = vmatprep.subr.mxu0 0.0
    %2664 = vmatpush1.msra.mxu0 %v2646
    %2665 = vmatprep.subr.mxu0 0.0
    %2666 = vmatpush1.msra.mxu0 0.0
    %2667 = vmatprep.subr.mxu0 0.0
    %2668 = vmatpush1.msra.mxu0 0.0
    %2669 = vmatprep.subr.mxu0 0.0
    %2670 = vmatpush1.msra.mxu0 0.0
    %2671 = vmatprep.subr.mxu0 0.0
    %2672 = vmatpush1.msra.mxu0 0.0
    %2673 = vmatprep.subr.mxu0 0.0
    %2674 = vmatpush1.msra.mxu0 0.0
    %2675 = vmatprep.subr.mxu0 0.0
    %2676 = vmatpush1.msra.mxu0 0.0
    %2677 = vmatprep.subr.mxu0 0.0
    %2678 = vmatpush1.msra.mxu0 0.0
    %2679 = vmatprep.subr.mxu0 0.0
    %2680 = vmatpush1.msra.mxu0 0.0
    %2681 = vmatprep.subr.mxu0 0.0
    %2682 = vmatpush1.msra.mxu0 0.0
    %2683 = vmatprep.subr.mxu0 0.0
    %2684 = vmatpush1.msra.mxu0 0.0
    %2685 = vmatprep.subr.mxu0 0.0
    %2686 = vmatpush1.msra.mxu0 0.0
    %2687 = vmatprep.subr.mxu0 0.0
    %2688 = vmatpush1.msra.mxu0 0.0
    %2689 = vmatprep.subr.mxu0 0.0
    %2690 = vmatpush1.msra.mxu0 0.0
    %2691 = vmatprep.subr.mxu0 0.0
    %2692 = vmatpush1.msra.mxu0 0.0
    %2693 = vmatprep.subr.mxu0 0.0
    %2694 = vmatpush1.msra.mxu0 0.0
    %2695 = vmatprep.subr.mxu0 0.0
    %2696 = vmatpush1.msra.mxu0 0.0
    %2697 = vmatprep.subr.mxu0 0.0
    %2698 = vmatpush1.msra.mxu0 0.0
    %2699 = vmatprep.subr.mxu0 0.0
    %2700 = vmatpush1.msra.mxu0 0.0
    %2701 = vmatprep.subr.mxu0 0.0
    %2702 = vmatpush1.msra.mxu0 0.0
    %2703 = vmatprep.subr.mxu0 0.0
    %2704 = vmatpush1.msra.mxu0 0.0
    %2705 = vmatprep.subr.mxu0 0.0
    %2706 = vmatpush1.msra.mxu0 0.0
    %2707 = vmatprep.subr.mxu0 0.0
    %2708 = vmatpush1.msra.mxu0 0.0
    %2709 = vmatprep.subr.mxu0 0.0
    %2710 = vmatpush1.msra.mxu0 0.0
    %2711 = vmatprep.subr.mxu0 0.0
    %2712 = vmatpush1.msra.mxu0 0.0
    %2713 = vmatprep.subr.mxu0 0.0
    %2714 = vmatpush1.msra.mxu0 0.0
    %2715 = vmatprep.subr.mxu0 0.0
    %2716 = vmatpush1.msra.mxu0 0.0
    %2717 = vmatprep.subr.mxu0 0.0
    %2718 = vmatpush1.msra.mxu0 0.0
    %2719 = vmatprep.subr.mxu0 0.0
    %2720 = vmatpush1.msra.mxu0 0.0
    %2721 = vmatprep.mubr.f32.mxu0 0.0
    %2722 = vmatmul.mubr.f32.gmra.mrb[0].mxu0 %v2652
    %v2723 = vpop.f32.mrb[0].mxu0
    %v2724 = vadd.f32 %v2650, %v2723
    %v2725 = vpop.f32.mrb[0].mxu0
    %2726 = vmatprep.mubr.f32.mxu0 0.0
    %2727 = vmatmul.mubr.f32.gmra.mrb[0].mxu0 %v2655
    %v2728 = vpop.f32.mrb[0].mxu0
    %v2729 = vadd.f32 %v2650, %v2728
    %v2730 = vpop.f32.mrb[0].mxu0
    %2731 = vdwg.mxu0
    %v2732 = vmul.f32 %v2724, 0.5
    %v2733 = vmul.f32 %v2729, 0.5
    %v2734 = vmul.f32 %v2724, 0.044715
    %v2735 = vmul.f32 %v2729, 0.044715
    %v2736 = vmul.f32 %v2734, %v2724
    %v2737 = vmul.f32 %v2735, %v2729
    %v2738 = vmul.f32 %v2736, %v2724
    %v2739 = vmul.f32 %v2737, %v2729
    %v2740 = vadd.f32 %v2724, %v2738
    %v2741 = vadd.f32 %v2729, %v2739
    %v2742 = vmul.f32 %v2740, 0.7978846
    %v2743 = vmul.f32 %v2741, 0.7978846
    %v2744 = vtanh.pop %v2742
    %v2745 = vtanh.pop %v2743
    %v2746 = vadd.f32 %v2744, 1.0
    %v2747 = vadd.f32 %v2745, 1.0
    %v2748 = vmul.f32 %v2732, %v2746
    %v2749 = vmul.f32 %v2733, %v2747
    %v2750 = vld [vmem:[%s4] sm:$0xff]
    %v2751 = vld [vmem:[%s4 + $0x8] sm:$0xff]
    %v2752 = vld [vmem:[%s4 + $0x10] sm:$0xff]
    %v2753 = vld [vmem:[%s4 + $0x18] sm:$0xff]
    %v2754 = vld [vmem:[%s4 + $0x20] sm:$0xff]
    %v2755 = vld [vmem:[%s4 + $0x28] sm:$0xff]
    %v2756 = vld [vmem:[%s4 + $0x30] sm:$0xff]
    %v2757 = vld [vmem:[%s4 + $0x38] sm:$0xff]
    %v2758 = vld [vmem:[%s4 + $0x40] sm:$0xff]
    %v2759 = vld [vmem:[%s4 + $0x48] sm:$0xff]
    %v2760 = vld [vmem:[%s4 + $0x50] sm:$0xff]
    %v2761 = vld [vmem:[%s4 + $0x58] sm:$0xff]
    %v2762 = vld [vmem:[%s4 + $0x60] sm:$0xff]
    %v2763 = vld [vmem:[%s4 + $0x68] sm:$0xff]
    %v2764 = vld [vmem:[%s4 + $0x70] sm:$0xff]
    %v2765 = vld [vmem:[%s4 + $0x78] sm:$0xff]
    %v2766 = vlaneseq
    %v2767 = vshrl.u32 %v2766, 7
    %v2768 = vsub.s32 5, %v2767
    %v2769 = vrot.slane %v26, %v2768
    %2770 = vmatprep.subr.mxu0 0.0
    %2771 = vmatpush1.msra.mxu0 %v2750
    %2772 = vmatprep.subr.mxu0 0.0
    %2773 = vmatpush1.msra.mxu0 %v2751
    %2774 = vmatprep.subr.mxu0 0.0
    %2775 = vmatpush1.msra.mxu0 %v2752
    %2776 = vmatprep.subr.mxu0 0.0
    %2777 = vmatpush1.msra.mxu0 %v2753
    %2778 = vmatprep.subr.mxu0 0.0
    %2779 = vmatpush1.msra.mxu0 %v2754
    %2780 = vmatprep.subr.mxu0 0.0
    %2781 = vmatpush1.msra.mxu0 %v2755
    %2782 = vmatprep.subr.mxu0 0.0
    %2783 = vmatpush1.msra.mxu0 %v2756
    %2784 = vmatprep.subr.mxu0 0.0
    %2785 = vmatpush1.msra.mxu0 %v2757
    %2786 = vmatprep.subr.mxu0 0.0
    %2787 = vmatpush1.msra.mxu0 %v2758
    %2788 = vmatprep.subr.mxu0 0.0
    %2789 = vmatpush1.msra.mxu0 %v2759
    %2790 = vmatprep.subr.mxu0 0.0
    %2791 = vmatpush1.msra.mxu0 %v2760
    %2792 = vmatprep.subr.mxu0 0.0
    %2793 = vmatpush1.msra.mxu0 %v2761
    %2794 = vmatprep.subr.mxu0 0.0
    %2795 = vmatpush1.msra.mxu0 %v2762
    %2796 = vmatprep.subr.mxu0 0.0
    %2797 = vmatpush1.msra.mxu0 %v2763
    %2798 = vmatprep.subr.mxu0 0.0
    %2799 = vmatpush1.msra.mxu0 %v2764
    %2800 = vmatprep.subr.mxu0 0.0
    %2801 = vmatpush1.msra.mxu0 %v2765
    %2802 = vmatprep.subr.mxu0 0.0
    %2803 = vmatpush1.msra.mxu0 0.0
    %2804 = vmatprep.subr.mxu0 0.0
    %2805 = vmatpush1.msra.mxu0 0.0
    %2806 = vmatprep.subr.mxu0 0.0
    %2807 = vmatpush1.msra.mxu0 0.0
    %2808 = vmatprep.subr.mxu0 0.0
    %2809 = vmatpush1.msra.mxu0 0.0
    %2810 = vmatprep.subr.mxu0 0.0
    %2811 = vmatpush1.msra.mxu0 0.0
    %2812 = vmatprep.subr.mxu0 0.0
    %2813 = vmatpush1.msra.mxu0 0.0
    %2814 = vmatprep.subr.mxu0 0.0
    %2815 = vmatpush1.msra.mxu0 0.0
    %2816 = vmatprep.subr.mxu0 0.0
    %2817 = vmatpush1.msra.mxu0 0.0
    %2818 = vmatprep.subr.mxu0 0.0
    %2819 = vmatpush1.msra.mxu0 0.0
    %2820 = vmatprep.subr.mxu0 0.0
    %2821 = vmatpush1.msra.mxu0 0.0
    %2822 = vmatprep.subr.mxu0 0.0
    %2823 = vmatpush1.msra.mxu0 0.0
    %2824 = vmatprep.subr.mxu0 0.0
    %2825 = vmatpush1.msra.mxu0 0.0
    %2826 = vmatprep.subr.mxu0 0.0
    %2827 = vmatpush1.msra.mxu0 0.0
    %2828 = vmatprep.subr.mxu0 0.0
    %2829 = vmatpush1.msra.mxu0 0.0
    %2830 = vmatprep.subr.mxu0 0.0
    %2831 = vmatpush1.msra.mxu0 0.0
    %2832 = vmatprep.subr.mxu0 0.0
    %2833 = vmatpush1.msra.mxu0 0.0
    %2834 = vmatprep.mubr.f32.mxu0 0.0
    %2835 = vmatmul.mubr.f32.gmra.mrb[0].mxu0 %v2748
    %v2836 = vpop.f32.mrb[0].mxu0
    %v2837 = vadd.f32 %v2769, %v2836
    %v2838 = vpop.f32.mrb[0].mxu0
    %2839 = vmatprep.mubr.f32.mxu0 0.0
    %2840 = vmatmul.mubr.f32.gmra.mrb[0].mxu0 %v2749
    %v2841 = vpop.f32.mrb[0].mxu0
    %v2842 = vadd.f32 %v2769, %v2841
    %v2843 = vpop.f32.mrb[0].mxu0
    %2844 = vdwg.mxu0
    %v2845 = vadd.f32 %v2603, %v2837
    %v2846 = vadd.f32 %v2604, %v2842
    %2847 = vst.msk [vmem:[#allocation2] sm:$0xff] %vm27, %v2845
    %2848 = vst.msk [vmem:[#allocation2 + $0x8] sm:$0xff] %vm27, %v2846
    // Predicated region
    $region26: #{tpu_custom_call.1} parent=1 // pred_check
      _
    $region27: #{tpu_custom_call.1} parent=1 // pred_check_branch
      %2850 = sbr.rel (0) target = $region29
    $region28: #{tpu_custom_call.1} parent=1 // pred_region
      %s2852 = ssub.s32 256, 256
      %2853 = vsyncadd [#allocation3], %s2852
      %s2854 = sshll.u32 [#allocation2], 4
      %s2855 = int_to_ptr.vmem [resolvable:$true] %s2854
      %2860 = dma.vmem_to_hbm [thread:$0]  %s2855, 256, %s6, [#allocation3], 128, 128, 8
    $region29: #{tpu_custom_call.1} parent=1 // pred_fallthru
      _
    // Predicated region
    $region30: #{tpu_custom_call.1} parent=1 // pred_check
      _
    $region31: #{tpu_custom_call.1} parent=1 // pred_check_branch
      %2862 = sbr.rel (0) target = $region33
    $region32: #{tpu_custom_call.1} parent=1 // pred_region
      %2863 = dma.done [#allocation3], 256
    $region33: #{tpu_custom_call.1} parent=1 // pred_fallthru
      _
    %2864 = vsyncpa [#allocation3], 1

</llo_original>
